<compile_context>
chip_gen: v7x
topology: tpu7x:2x2x1
jax: 0.10.0
libtpu: 0.0.40
codegen_flags: <defaults>
</compile_context>

<pallas_src>
import functools
import math

import jax
import jax.numpy as jnp
from jax.experimental import pallas as pl
from jax.experimental.pallas import tpu as pltpu

C_IN = 256
C_KEY = 128
C_VAL = 256
C_QRY = 128
C_TOT = C_KEY + C_VAL + C_QRY  # 512


def _round_up(x, m):
    return (x + m - 1) // m * m


def _cdiv(a, b):
    return -(-a // b)


# ---------------------------------------------------------------------------
# Kernel: one grid step projects an (nb, C_IN, tl) slab of x into the three
# outputs, streaming k, v, q one at a time against the resident fused W^T so
# the live f32 intermediate never exceeds (C_VAL, tl).
# ---------------------------------------------------------------------------
def _tkv_kernel(x_ref, wt_ref, bt_ref, k_ref, v_ref, q_ref):
    nb = x_ref.shape[0]
    for b in range(nb):                      # nb is small & static (unrolled)
        x = x_ref[b]                         # (C_IN, tl), read once from VMEM
        k_ref[b] = (jnp.dot(wt_ref[0:C_KEY, :], x,
                            preferred_element_type=jnp.float32)
                    + bt_ref[0:C_KEY, :]).astype(k_ref.dtype)
        v_ref[b] = (jnp.dot(wt_ref[C_KEY:C_KEY + C_VAL, :], x,
                            preferred_element_type=jnp.float32)
                    + bt_ref[C_KEY:C_KEY + C_VAL, :]).astype(v_ref.dtype)
        q_ref[b] = (jnp.dot(wt_ref[C_KEY + C_VAL:C_TOT, :], x,
                            preferred_element_type=jnp.float32)
                    + bt_ref[C_KEY + C_VAL:C_TOT, :]).astype(q_ref.dtype)


# ---------------------------------------------------------------------------
# Public wrapper.
# ---------------------------------------------------------------------------
@functools.partial(jax.jit, static_argnames=("tl",))
def temporal_key_value(x, wt, bt, *, tl=2048):
    """x: (N, 256, L) f32.  wt: (512, 256) fused [Wk; Wv; Wq] (PyTorch Conv1d
    k=1 weights, kernel dim squeezed); bt: (512, 1) fused bias.
    Returns (key, value, query) in NCL layout matching the PyTorch module:
    (N, 128, L), (N, 256, L), (N, 128, L)."""
    n, c, l = x.shape
    assert c == C_IN
    assert wt.shape == (C_TOT, C_IN) and bt.shape == (C_TOT, 1)

    # Lane axis padded to a vreg multiple (no-op for the common L % 128 == 0).
    l_pad = _round_up(l, 128)
    if l_pad != l:
        x = jnp.pad(x, ((0, 0), (0, 0), (0, l_pad - l)))

    # Lane tile: as big as requested, never beyond the (padded) sequence.
    tl_tgt = max(128, _round_up(tl, 128))
    tl_eff = min(tl_tgt, l_pad)

    # Pack several batches per grid step when L is small, so each sequential
    # grid step still moves a multi-MiB slab (amortizes the ~0.35 us step cost
    # and issues fewer, longer DMAs).
    nb_max = max(1, tl_tgt // tl_eff)
    nb = 1
    for d in range(1, min(n, nb_max) + 1):
        if n % d == 0:
            nb = d
    grid_n = n // nb
    grid_l = _cdiv(l_pad, tl_eff)

    # Guarantee >= 2 grid steps when cheaply possible so both v7x TensorCores
    # get work ("parallel" semantics shard grid steps across TCs).
    if grid_n * grid_l == 1:
        if nb > 1 and nb % 2 == 0:
            nb //= 2
            grid_n = n // nb
        elif tl_eff >= 256:
            tl_eff = _round_up(tl_eff // 2, 128)
            grid_l = _cdiv(l_pad, tl_eff)

    x_map = lambda i, j: (i, 0, j)
    o_map = lambda i, j: (i, 0, j)
    w_map = lambda i, j: (0, 0)

    # HBM traffic / MXU work hints for XLA's scheduler.
    flops = 2 * n * l_pad * C_IN * C_TOT
    bytes_accessed = 4 * (n * l_pad * (C_IN + C_TOT) + C_TOT * C_IN + C_TOT)

    # Explicit scoped-VMEM budget: double-buffered x + k/v/q blocks + weights,
    # plus margin; capped well below v7x's 64 MiB physical VMEM.
    block_bytes = 4 * nb * tl_eff * (C_IN + C_TOT)
    w_bytes = 4 * (C_TOT * C_IN + C_TOT)
    vmem_limit = min(56 * 1024 * 1024,
                     max(16 * 1024 * 1024,
                         2 * (block_bytes + w_bytes) + (6 << 20)))

    k, v, q = pl.pallas_call(
        _tkv_kernel,
        out_shape=(
            jax.ShapeDtypeStruct((n, C_KEY, l_pad), x.dtype),
            jax.ShapeDtypeStruct((n, C_VAL, l_pad), x.dtype),
            jax.ShapeDtypeStruct((n, C_QRY, l_pad), x.dtype),
        ),
        grid_spec=pltpu.PrefetchScalarGridSpec(
            num_scalar_prefetch=0,
            grid=(grid_n, grid_l),
            in_specs=[
                pl.BlockSpec((nb, C_IN, tl_eff), x_map),   # x slab (C on sublanes)
                pl.BlockSpec((C_TOT, C_IN), w_map),        # fused W^T (resident)
                pl.BlockSpec((C_TOT, 1), w_map),           # fused bias (resident)
            ],
            out_specs=[
                pl.BlockSpec((nb, C_KEY, tl_eff), o_map),
                pl.BlockSpec((nb, C_VAL, tl_eff), o_map),
                pl.BlockSpec((nb, C_QRY, tl_eff), o_map),
            ],
        ),
        compiler_params=pltpu.CompilerParams(
            dimension_semantics=("parallel", "parallel"),
            vmem_limit_bytes=vmem_limit),
        cost_estimate=pl.CostEstimate(
            flops=flops, transcendentals=0, bytes_accessed=bytes_accessed),
    )(x, wt, bt)

    if l_pad != l:
        k, v, q = k[:, :, :l], v[:, :, :l], q[:, :, :l]
    return k, v, q


# ---------------------------------------------------------------------------
# Parameters (PyTorch Conv1d(k=1) layout) + one-time packing.
# ---------------------------------------------------------------------------
def init_params(key):
    """Deterministic synthetic Conv1d(k=1) params: weight (O, C), bias (O,)."""
    ks = jax.random.split(key, 6)

    def conv1x1(kw, kb, c_in, c_out):
        bound = 1.0 / math.sqrt(c_in)
        w = jax.random.uniform(kw, (c_out, c_in), jnp.float32, -bound, bound)
        b = jax.random.uniform(kb, (c_out,), jnp.float32, -bound, bound)
        return w, b

    return {
        "key": conv1x1(ks[0], ks[1], C_IN, C_KEY),
        "value": conv1x1(ks[2], ks[3], C_IN, C_VAL),
        "query": conv1x1(ks[4], ks[5], C_IN, C_QRY),
    }


def pack_params(params):
    """One-time fusion of the three projections into a (512, 256) weight and
    (512, 1) bias (done once, outside the per-call jit)."""
    wk, bk = params["key"]
    wv, bv = params["value"]
    wq, bq = params["query"]
    wt = jnp.concatenate([wk, wv, wq], axis=0)            # (512, 256)
    bt = jnp.concatenate([bk, bv, bq], axis=0)[:, None]   # (512, 1)
    return wt, bt


def _reference(x, params):
    def proj(w, b):
        return jnp.einsum("oc,ncl->nol", w, x) + b[None, :, None]

    return (proj(*params["key"]), proj(*params["value"]), proj(*params["query"]))


if __name__ == "__main__":
    root = jax.random.PRNGKey(0)
    kp, kx1, kx2 = jax.random.split(root, 3)

    params = init_params(kp)
    wt, bt = pack_params(params)

    # Ragged small L -> exercises lane padding + batch packing.
    x_small = jax.random.normal(kx1, (2, C_IN, 16), jnp.float32)
    # Aligned L -> zero-glue native-NCL path, >= 2 grid steps for megacore.
    x_big = jax.random.normal(kx2, (1, C_IN, 256), jnp.float32)

    for x in (x_small, x_big):
        outs = jax.block_until_ready(temporal_key_value(x, wt, bt))
        refs = _reference(x, params)
        for o, r in zip(outs, refs):
            assert o.shape == r.shape, (o.shape, r.shape)
            err = float(jnp.max(jnp.abs(o - r)))
            assert err < 1e-4, err

    print("KERNEL_OK")
</pallas_src>

<mosaic_0001>
module attributes {stable_mosaic.version = 11 : i64} {
  func.func @_tkv_kernel(%arg0: i32, %arg1: i32, %arg2: memref<1x256x128xf32, #tpu.memory_space<vmem>>, %arg3: memref<512x256xf32, #tpu.memory_space<vmem>>, %arg4: memref<512x1xf32, #tpu.memory_space<vmem>>, %arg5: memref<1x128x128xf32, #tpu.memory_space<vmem>>, %arg6: memref<1x256x128xf32, #tpu.memory_space<vmem>>, %arg7: memref<1x128x128xf32, #tpu.memory_space<vmem>>) attributes {dimension_semantics = [#tpu.dimension_semantics<parallel>, #tpu.dimension_semantics<parallel>], iteration_bounds = array<i64: 2, 1>, scalar_prefetch = 0 : i64, scratch_operands = 0 : i64, tpu.core_type = #tpu.core_type<tc>, window_params = [{transform_indices = @transform_0, window_bounds = array<i64: 1, 256, 128>}, {pipeline_mode = #tpu.pipeline_mode<synchronous>, transform_indices = @transform_1, window_bounds = array<i64: 512, 256>}, {pipeline_mode = #tpu.pipeline_mode<synchronous>, transform_indices = @transform_2, window_bounds = array<i64: 512, 1>}, {transform_indices = @transform_3, window_bounds = array<i64: 1, 128, 128>}, {transform_indices = @transform_4, window_bounds = array<i64: 1, 256, 128>}, {transform_indices = @transform_5, window_bounds = array<i64: 1, 128, 128>}]} {
    %c0 = arith.constant 0 : index
    %c0_0 = arith.constant 0 : index
    %c0_1 = arith.constant 0 : index
    %0 = vector.load %arg2[%c0, %c0_0, %c0_1] : memref<1x256x128xf32, #tpu.memory_space<vmem>>, vector<1x256x128xf32>
    %1 = vector.shape_cast %0 : vector<1x256x128xf32> to vector<256x128xf32>
    %c0_2 = arith.constant 0 : index
    %c0_3 = arith.constant 0 : index
    %2 = vector.load %arg3[%c0_2, %c0_3] : memref<512x256xf32, #tpu.memory_space<vmem>>, vector<128x256xf32>
    %cst = arith.constant dense<0.000000e+00> : vector<128x128xf32>
    %3 = tpu.matmul %2, %1, %cst {dimension_numbers = #tpu.dot_dimension_numbers<[1], [0], [0], [1], [0, 0, 1, 1], [], []>} : vector<128x256xf32>, vector<256x128xf32>, vector<128x128xf32> -> vector<128x128xf32>
    %c0_4 = arith.constant 0 : index
    %c0_5 = arith.constant 0 : index
    %4 = vector.load %arg4[%c0_4, %c0_5] : memref<512x1xf32, #tpu.memory_space<vmem>>, vector<128x1xf32>
    %5 = vector.broadcast %4 : vector<128x1xf32> to vector<128x128xf32>
    %6 = arith.addf %3, %5 : vector<128x128xf32>
    %c0_6 = arith.constant 0 : index
    %c0_7 = arith.constant 0 : index
    %c0_8 = arith.constant 0 : index
    %7 = vector.load %arg5[%c0_6, %c0_7, %c0_8] : memref<1x128x128xf32, #tpu.memory_space<vmem>>, vector<1x128x128xf32>
    %8 = vector.shape_cast %7 : vector<1x128x128xf32> to vector<128x128xf32>
    %9 = vector.shape_cast %6 : vector<128x128xf32> to vector<1x128x128xf32>
    tpu.vector_store %arg5[%c0_6, %c0_7, %c0_8], %9 {strides = array<i32>} : memref<1x128x128xf32, #tpu.memory_space<vmem>>, vector<1x128x128xf32>,
    %c128 = arith.constant 128 : index
    %c0_9 = arith.constant 0 : index
    %10 = vector.load %arg3[%c128, %c0_9] : memref<512x256xf32, #tpu.memory_space<vmem>>, vector<256x256xf32>
    %cst_10 = arith.constant dense<0.000000e+00> : vector<256x128xf32>
    %11 = tpu.matmul %10, %1, %cst_10 {dimension_numbers = #tpu.dot_dimension_numbers<[1], [0], [0], [1], [0, 0, 1, 1], [], []>} : vector<256x256xf32>, vector<256x128xf32>, vector<256x128xf32> -> vector<256x128xf32>
    %c128_11 = arith.constant 128 : index
    %c0_12 = arith.constant 0 : index
    %12 = vector.load %arg4[%c128_11, %c0_12] : memref<512x1xf32, #tpu.memory_space<vmem>>, vector<256x1xf32>
    %13 = vector.broadcast %12 : vector<256x1xf32> to vector<256x128xf32>
    %14 = arith.addf %11, %13 : vector<256x128xf32>
    %c0_13 = arith.constant 0 : index
    %c0_14 = arith.constant 0 : index
    %c0_15 = arith.constant 0 : index
    %15 = vector.load %arg6[%c0_13, %c0_14, %c0_15] : memref<1x256x128xf32, #tpu.memory_space<vmem>>, vector<1x256x128xf32>
    %16 = vector.shape_cast %15 : vector<1x256x128xf32> to vector<256x128xf32>
    %17 = vector.shape_cast %14 : vector<256x128xf32> to vector<1x256x128xf32>
    tpu.vector_store %arg6[%c0_13, %c0_14, %c0_15], %17 {strides = array<i32>} : memref<1x256x128xf32, #tpu.memory_space<vmem>>, vector<1x256x128xf32>,
    %c384 = arith.constant 384 : index
    %c0_16 = arith.constant 0 : index
    %18 = vector.load %arg3[%c384, %c0_16] : memref<512x256xf32, #tpu.memory_space<vmem>>, vector<128x256xf32>
    %cst_17 = arith.constant dense<0.000000e+00> : vector<128x128xf32>
    %19 = tpu.matmul %18, %1, %cst_17 {dimension_numbers = #tpu.dot_dimension_numbers<[1], [0], [0], [1], [0, 0, 1, 1], [], []>} : vector<128x256xf32>, vector<256x128xf32>, vector<128x128xf32> -> vector<128x128xf32>
    %c384_18 = arith.constant 384 : index
    %c0_19 = arith.constant 0 : index
    %20 = vector.load %arg4[%c384_18, %c0_19] : memref<512x1xf32, #tpu.memory_space<vmem>>, vector<128x1xf32>
    %21 = vector.broadcast %20 : vector<128x1xf32> to vector<128x128xf32>
    %22 = arith.addf %19, %21 : vector<128x128xf32>
    %c0_20 = arith.constant 0 : index
    %c0_21 = arith.constant 0 : index
    %c0_22 = arith.constant 0 : index
    %23 = vector.load %arg7[%c0_20, %c0_21, %c0_22] : memref<1x128x128xf32, #tpu.memory_space<vmem>>, vector<1x128x128xf32>
    %24 = vector.shape_cast %23 : vector<1x128x128xf32> to vector<128x128xf32>
    %25 = vector.shape_cast %22 : vector<128x128xf32> to vector<1x128x128xf32>
    tpu.vector_store %arg7[%c0_20, %c0_21, %c0_22], %25 {strides = array<i32>} : memref<1x128x128xf32, #tpu.memory_space<vmem>>, vector<1x128x128xf32>,
    return
  }
  func.func @transform_0(%arg0: i32, %arg1: i32) -> (i32, i32, i32) {
    %c0_i32 = arith.constant 0 : i32
    %c0_i32_0 = arith.constant 0 : i32
    return %arg0, %c0_i32, %arg1 : i32, i32, i32
  }
  func.func @transform_1(%arg0: i32, %arg1: i32) -> (i32, i32) {
    %c0_i32 = arith.constant 0 : i32
    %c0_i32_0 = arith.constant 0 : i32
    %c0_i32_1 = arith.constant 0 : i32
    return %c0_i32, %c0_i32_0 : i32, i32
  }
  func.func @transform_2(%arg0: i32, %arg1: i32) -> (i32, i32) {
    %c0_i32 = arith.constant 0 : i32
    %c0_i32_0 = arith.constant 0 : i32
    %c0_i32_1 = arith.constant 0 : i32
    return %c0_i32, %c0_i32_0 : i32, i32
  }
  func.func @transform_3(%arg0: i32, %arg1: i32) -> (i32, i32, i32) {
    %c0_i32 = arith.constant 0 : i32
    %c0_i32_0 = arith.constant 0 : i32
    return %arg0, %c0_i32, %arg1 : i32, i32, i32
  }
  func.func @transform_4(%arg0: i32, %arg1: i32) -> (i32, i32, i32) {
    %c0_i32 = arith.constant 0 : i32
    %c0_i32_0 = arith.constant 0 : i32
    return %arg0, %c0_i32, %arg1 : i32, i32, i32
  }
  func.func @transform_5(%arg0: i32, %arg1: i32) -> (i32, i32, i32) {
    %c0_i32 = arith.constant 0 : i32
    %c0_i32_0 = arith.constant 0 : i32
    return %arg0, %c0_i32, %arg1 : i32, i32, i32
  }
}

</mosaic_0001>

<llo_original>
// kernel: temporal_key_value.1
$region0: #{temporal_key_value.1}
  #allocation0 [shape = 'u32[]', space=smem, size = 0x4, offset = 0x4, fixed_abs, tag = 'smem constant byte address 0x4 - core index']
  #allocation1 [shape = 'u32[144,128]{1,0:T(1,128)}', space=vmem, size = 0x12000, scoped, tag = 'internal scratch']
  %s0 = inlined_call_operand.vmem [shape: f32[2,256,128], index: 0, kind: input, shape index: {}]
  %s1 = inlined_call_operand.vmem [shape: f32[512,256], index: 1, kind: input, shape index: {}]
  %s2 = inlined_call_operand.vmem [shape: f32[512,1], index: 2, kind: input, shape index: {}]
  %s3 = inlined_call_operand.vmem [shape: f32[2,128,128], index: 3, kind: output, shape index: {0}]
  %s4 = inlined_call_operand.vmem [shape: f32[2,256,128], index: 4, kind: output, shape index: {1}]
  %s5 = inlined_call_operand.vmem [shape: f32[2,128,128], index: 5, kind: output, shape index: {2}]
  %6 = xla_tuple %s3, %s4, %s5
  %s7 = sld [smem:[#allocation0]]
  $region61: #{temporal_key_value.1} parent=0
    _
  %s9 = ssub.s32 1, %s7
  %s10 = scalar_select 0, %s9, %s7
  loop: start=0, step=1, limit=4
  $region2: #{temporal_key_value.1} parent=0 // loop_pre_header
    _
  $region3: #{temporal_key_value.1} parent=0 // loop_header
    %s12 = sphi 0, %s16
    %p13 = scmp.ge.s32.totalorder %s12, 4
    %s19 = sphi 0, %s31
    %s20 = sphi 0, %s27
    %s21 = sphi 0, %s19
    %s22 = sphi 0, %s20
    %s23 = sphi 0, %s21
    %s24 = sphi 0, %s22
    %s36 = sphi 0, %s38
    %s39 = sphi 0, %s36
    %s40 = sphi 0, %s39
    %s56 = sphi 0, %s40
    %s60 = sphi 0, %s60
    %s62 = sphi 0, %s60
    %s63 = sphi 0, %s62
    %s77 = sphi 0, %s63
    %s81 = sphi 0, %s81
    %s83 = sphi 0, %s81
    %s84 = sphi 0, %s83
    %s98 = sphi 0, %s84
    %s106 = sphi 0, %s108
    %s109 = sphi 0, %s106
    %s110 = sphi 0, %s109
    %s126 = sphi 0, %s110
    %s134 = sphi 0, %s136
    %s137 = sphi 0, %s134
    %s138 = sphi 0, %s137
    %s154 = sphi 0, %s138
    %s162 = sphi 0, %s164
    %s165 = sphi 0, %s162
    %s166 = sphi 0, %s165
    %s182 = sphi 0, %s166
  $region4: #{temporal_key_value.1} parent=0 // loop_header_branch
    %15 = sbr.rel (%p13) target = $region8
  $region5: #{temporal_key_value.1} parent=0 // loop_body
    %s17 = ssub.s32 %s12, 1
    %s18 = ssub.s32 %s12, 2
    %s25 = sadd.s32 1, %s20
    %p26 = scmp.ge.s32.totalorder %s25, 1
    %s27 = scalar_select %p26, 0, %s25
    %s28 = sadd.s32 1, %s19
    %s29 = scalar_select %p26, %s28, %s19
    %p30 = scmp.ge.s32.totalorder %s29, 2
    %s31 = scalar_select %p30, 0, %s29
    %s32 = ssub.s32 %s19, %s31
    %s33 = ssub.s32 %s20, %s27
    %s34 = sor.u32 %s32, %s33
    %p35 = scmp.eq.s32.totalorder %s34, 0
    %s37 = sadd.s32 %s36, 1
    %s38 = scalar_select %p35, %s36, %s37
    %p41 = pneg %p35
    %p42 = scmp.eq.s32.totalorder %s12, 1
    %p43 = por %p41, %p42
    %p44 = scmp.ne.s32.totalorder %s36, %s39
    %p45 = scmp.eq.s32.totalorder %s12, 0
    %p46 = por %p44, %p45
    %p47 = scmp.ne.s32.totalorder %s36, %s39
    %p48 = scmp.eq.s32.totalorder %s17, 1
    %p49 = por %p47, %p48
    %p50 = scmp.ne.s32.totalorder %s39, %s40
    %p51 = scmp.eq.s32.totalorder %s17, 0
    %p52 = por %p50, %p51
    %p53 = scmp.ne.s32.totalorder %s39, %s40
    %p54 = scmp.eq.s32.totalorder %s18, 1
    %p55 = por %p53, %p54
    %p57 = scmp.ne.s32.totalorder %s40, %s56
    %p58 = scmp.eq.s32.totalorder %s18, 0
    %p59 = por %p57, %p58
    %s61 = sadd.s32 %s60, 1
    %p64 = scmp.eq.s32.totalorder %s12, 1
    %p65 = scmp.ne.s32.totalorder %s60, %s62
    %p66 = scmp.eq.s32.totalorder %s12, 0
    %p67 = por %p65, %p66
    %p68 = scmp.ne.s32.totalorder %s60, %s62
    %p69 = scmp.eq.s32.totalorder %s17, 1
    %p70 = por %p68, %p69
    %p71 = scmp.ne.s32.totalorder %s62, %s63
    %p72 = scmp.eq.s32.totalorder %s17, 0
    %p73 = por %p71, %p72
    %p74 = scmp.ne.s32.totalorder %s62, %s63
    %p75 = scmp.eq.s32.totalorder %s18, 1
    %p76 = por %p74, %p75
    %p78 = scmp.ne.s32.totalorder %s63, %s77
    %p79 = scmp.eq.s32.totalorder %s18, 0
    %p80 = por %p78, %p79
    %s82 = sadd.s32 %s81, 1
    %p85 = scmp.eq.s32.totalorder %s12, 1
    %p86 = scmp.ne.s32.totalorder %s81, %s83
    %p87 = scmp.eq.s32.totalorder %s12, 0
    %p88 = por %p86, %p87
    %p89 = scmp.ne.s32.totalorder %s81, %s83
    %p90 = scmp.eq.s32.totalorder %s17, 1
    %p91 = por %p89, %p90
    %p92 = scmp.ne.s32.totalorder %s83, %s84
    %p93 = scmp.eq.s32.totalorder %s17, 0
    %p94 = por %p92, %p93
    %p95 = scmp.ne.s32.totalorder %s83, %s84
    %p96 = scmp.eq.s32.totalorder %s18, 1
    %p97 = por %p95, %p96
    %p99 = scmp.ne.s32.totalorder %s84, %s98
    %p100 = scmp.eq.s32.totalorder %s18, 0
    %p101 = por %p99, %p100
    %s102 = ssub.s32 %s19, %s31
    %s103 = ssub.s32 %s20, %s27
    %s104 = sor.u32 %s102, %s103
    %p105 = scmp.eq.s32.totalorder %s104, 0
    %s107 = sadd.s32 %s106, 1
    %s108 = scalar_select %p105, %s106, %s107
    %p111 = pneg %p105
    %p112 = scmp.eq.s32.totalorder %s12, 1
    %p113 = por %p111, %p112
    %p114 = scmp.ne.s32.totalorder %s106, %s109
    %p115 = scmp.eq.s32.totalorder %s12, 0
    %p116 = por %p114, %p115
    %p117 = scmp.ne.s32.totalorder %s106, %s109
    %p118 = scmp.eq.s32.totalorder %s17, 1
    %p119 = por %p117, %p118
    %p120 = scmp.ne.s32.totalorder %s109, %s110
    %p121 = scmp.eq.s32.totalorder %s17, 0
    %p122 = por %p120, %p121
    %p123 = scmp.ne.s32.totalorder %s109, %s110
    %p124 = scmp.eq.s32.totalorder %s18, 1
    %p125 = por %p123, %p124
    %p127 = scmp.ne.s32.totalorder %s110, %s126
    %p128 = scmp.eq.s32.totalorder %s18, 0
    %p129 = por %p127, %p128
    %s130 = ssub.s32 %s19, %s31
    %s131 = ssub.s32 %s20, %s27
    %s132 = sor.u32 %s130, %s131
    %p133 = scmp.eq.s32.totalorder %s132, 0
    %s135 = sadd.s32 %s134, 1
    %s136 = scalar_select %p133, %s134, %s135
    %p139 = pneg %p133
    %p140 = scmp.eq.s32.totalorder %s12, 1
    %p141 = por %p139, %p140
    %p142 = scmp.ne.s32.totalorder %s134, %s137
    %p143 = scmp.eq.s32.totalorder %s12, 0
    %p144 = por %p142, %p143
    %p145 = scmp.ne.s32.totalorder %s134, %s137
    %p146 = scmp.eq.s32.totalorder %s17, 1
    %p147 = por %p145, %p146
    %p148 = scmp.ne.s32.totalorder %s137, %s138
    %p149 = scmp.eq.s32.totalorder %s17, 0
    %p150 = por %p148, %p149
    %p151 = scmp.ne.s32.totalorder %s137, %s138
    %p152 = scmp.eq.s32.totalorder %s18, 1
    %p153 = por %p151, %p152
    %p155 = scmp.ne.s32.totalorder %s138, %s154
    %p156 = scmp.eq.s32.totalorder %s18, 0
    %p157 = por %p155, %p156
    %s158 = ssub.s32 %s19, %s31
    %s159 = ssub.s32 %s20, %s27
    %s160 = sor.u32 %s158, %s159
    %p161 = scmp.eq.s32.totalorder %s160, 0
    %s163 = sadd.s32 %s162, 1
    %s164 = scalar_select %p161, %s162, %s163
    %p167 = pneg %p161
    %p168 = scmp.eq.s32.totalorder %s12, 1
    %p169 = por %p167, %p168
    %p170 = scmp.ne.s32.totalorder %s162, %s165
    %p171 = scmp.eq.s32.totalorder %s12, 0
    %p172 = por %p170, %p171
    %p173 = scmp.ne.s32.totalorder %s162, %s165
    %p174 = scmp.eq.s32.totalorder %s17, 1
    %p175 = por %p173, %p174
    %p176 = scmp.ne.s32.totalorder %s165, %s166
    %p177 = scmp.eq.s32.totalorder %s17, 0
    %p178 = por %p176, %p177
    %p179 = scmp.ne.s32.totalorder %s165, %s166
    %p180 = scmp.eq.s32.totalorder %s18, 1
    %p181 = por %p179, %p180
    %p183 = scmp.ne.s32.totalorder %s166, %s182
    %p184 = scmp.eq.s32.totalorder %s18, 0
    %p185 = por %p183, %p184
    %p186 = scmp.le.s32.totalorder 1, %s12
    %p187 = scmp.lt.s32.totalorder %s12, 3
    %p188 = pnand %p186, %p187
    %p189 = pneg %p188
    // Predicated region
    $region9: #{temporal_key_value.1} parent=5 // pred_check
      _
    $region10: #{temporal_key_value.1} parent=5 // pred_check_branch
      %191 = sbr.rel (%p188) target = $region12
    $region11: #{temporal_key_value.1} parent=5 // pred_region
      %s192 = ssub.s32 %s12, 1
      // Predicated region
      $region13: #{temporal_key_value.1} parent=11 // pred_check
        %p193 = pneg %p73
      $region14: #{temporal_key_value.1} parent=11 // pred_check_branch
        %195 = sbr.rel (%p193) target = $region16
      $region15: #{temporal_key_value.1} parent=11 // pred_region
        _
      $region16: #{temporal_key_value.1} parent=11 // pred_fallthru
        _
      // Predicated region
      $region17: #{temporal_key_value.1} parent=11 // pred_check
        %p196 = pneg %p94
      $region18: #{temporal_key_value.1} parent=11 // pred_check_branch
        %198 = sbr.rel (%p196) target = $region20
      $region19: #{temporal_key_value.1} parent=11 // pred_region
        _
      $region20: #{temporal_key_value.1} parent=11 // pred_fallthru
        _
    $region12: #{temporal_key_value.1} parent=5 // pred_fallthru
      _
    %p199 = scmp.lt.s32.totalorder %s12, 2
    // Predicated region
    $region21: #{temporal_key_value.1} parent=5 // pred_check
      %p200 = pneg %p199
    $region22: #{temporal_key_value.1} parent=5 // pred_check_branch
      %202 = sbr.rel (%p200) target = $region24
    $region23: #{temporal_key_value.1} parent=5 // pred_region
      // Predicated region
      $region25: #{temporal_key_value.1} parent=23 // pred_check
        %p203 = pneg %p46
      $region26: #{temporal_key_value.1} parent=23 // pred_check_branch
        %205 = sbr.rel (%p203) target = $region28
      $region27: #{temporal_key_value.1} parent=23 // pred_region
        %p206 = scmp.lt.s32.totalorder %s19, 1
        %s207 = scalar_select %p206, %s19, 1
        %p208 = scmp.lt.s32.totalorder %s20, 0
        %s209 = scalar_select %p208, %s20, 0
        %s210 = smul.addr %s207, 32
        %s211 = sadd.s32 %s209, %s210
        %s212 = smul.addr %s211, 8
        %s213 = scalar_lea.vmem %s0, %s212
      $region28: #{temporal_key_value.1} parent=23 // pred_fallthru
        _
    $region24: #{temporal_key_value.1} parent=5 // pred_fallthru
      _
    %p214 = scmp.le.s32.totalorder 1, %s12
    %p215 = scmp.lt.s32.totalorder %s12, 3
    %p216 = pnand %p214, %p215
    %p217 = pneg %p216
    // Predicated region
    $region29: #{temporal_key_value.1} parent=5 // pred_check
      _
    $region30: #{temporal_key_value.1} parent=5 // pred_check_branch
      %219 = sbr.rel (%p216) target = $region32
    $region31: #{temporal_key_value.1} parent=5 // pred_region
      %s220 = ssub.s32 %s12, 1
      %p221 = scmp.lt.s32.totalorder %s21, 1
      %s222 = scalar_select %p221, %s21, 1
      %p223 = scmp.lt.s32.totalorder %s22, 0
      %s224 = scalar_select %p223, %s22, 0
      %s225 = smul.addr %s222, 32
      %s226 = sadd.s32 %s224, %s225
      %s227 = smul.addr %s226, 8
      %s228 = scalar_lea.vmem %s0, %s227
      %p229 = pneg %p52
      %p230 = pneg %p49
      %p231 = pneg %p73
      %p232 = pneg %p70
      %p233 = pneg %p94
      %p234 = pneg %p91
      %p235 = pneg %p122
      %p236 = pneg %p119
      %p237 = scmp.lt.s32.totalorder %s21, 1
      %s238 = scalar_select %p237, %s21, 1
      %p239 = scmp.lt.s32.totalorder %s22, 0
      %s240 = scalar_select %p239, %s22, 0
      %s241 = smul.addr %s238, 16
      %s242 = sadd.s32 %s240, %s241
      %s243 = smul.addr %s242, 8
      %s244 = scalar_lea.vmem %s3, %s243
      %p245 = pneg %p150
      %p246 = pneg %p147
      %p247 = scmp.lt.s32.totalorder %s21, 1
      %s248 = scalar_select %p247, %s21, 1
      %p249 = scmp.lt.s32.totalorder %s22, 0
      %s250 = scalar_select %p249, %s22, 0
      %s251 = smul.addr %s248, 32
      %s252 = sadd.s32 %s250, %s251
      %s253 = smul.addr %s252, 8
      %s254 = scalar_lea.vmem %s4, %s253
      %p255 = pneg %p178
      %p256 = pneg %p175
      %p257 = scmp.lt.s32.totalorder %s21, 1
      %s258 = scalar_select %p257, %s21, 1
      %p259 = scmp.lt.s32.totalorder %s22, 0
      %s260 = scalar_select %p259, %s22, 0
      %s261 = smul.addr %s258, 16
      %s262 = sadd.s32 %s260, %s261
      %s263 = smul.addr %s262, 8
      %s264 = scalar_lea.vmem %s5, %s263
      %p265 = scmp.lt.s32.totalorder %s21, 1
      %s266 = scalar_select %p265, %s21, 1
      %p267 = scmp.lt.s32.totalorder %s22, 0
      %s268 = scalar_select %p267, %s22, 0
      %s269 = smul.addr %s266, 32
      %s270 = sadd.s32 %s268, %s269
      %s271 = smul.addr %s270, 8
      %s272 = scalar_lea.vmem %s0, %s271
      %p273 = scmp.lt.s32.totalorder %s21, 1
      %s274 = scalar_select %p273, %s21, 1
      %p275 = scmp.lt.s32.totalorder %s22, 0
      %s276 = scalar_select %p275, %s22, 0
      %s277 = smul.addr %s274, 16
      %s278 = sadd.s32 %s276, %s277
      %s279 = smul.addr %s278, 8
      %s280 = scalar_lea.vmem %s3, %s279
      %p281 = scmp.lt.s32.totalorder %s21, 1
      %s282 = scalar_select %p281, %s21, 1
      %p283 = scmp.lt.s32.totalorder %s22, 0
      %s284 = scalar_select %p283, %s22, 0
      %s285 = smul.addr %s282, 32
      %s286 = sadd.s32 %s284, %s285
      %s287 = smul.addr %s286, 8
      %s288 = scalar_lea.vmem %s4, %s287
      %p289 = scmp.lt.s32.totalorder %s21, 1
      %s290 = scalar_select %p289, %s21, 1
      %p291 = scmp.lt.s32.totalorder %s22, 0
      %s292 = scalar_select %p291, %s22, 0
      %s293 = smul.addr %s290, 16
      %s294 = sadd.s32 %s292, %s293
      %s295 = smul.addr %s294, 8
      %s296 = scalar_lea.vmem %s5, %s295
      %v297 = vld [vmem:[%s272] sm:$0xff]
      %v298 = vld [vmem:[%s272 + $0x8] sm:$0xff]
      %v299 = vld [vmem:[%s272 + $0x10] sm:$0xff]
      %v300 = vld [vmem:[%s272 + $0x18] sm:$0xff]
      %v301 = vld [vmem:[%s272 + $0x20] sm:$0xff]
      %v302 = vld [vmem:[%s272 + $0x28] sm:$0xff]
      %v303 = vld [vmem:[%s272 + $0x30] sm:$0xff]
      %v304 = vld [vmem:[%s272 + $0x38] sm:$0xff]
      %v305 = vld [vmem:[%s272 + $0x40] sm:$0xff]
      %v306 = vld [vmem:[%s272 + $0x48] sm:$0xff]
      %v307 = vld [vmem:[%s272 + $0x50] sm:$0xff]
      %v308 = vld [vmem:[%s272 + $0x58] sm:$0xff]
      %v309 = vld [vmem:[%s272 + $0x60] sm:$0xff]
      %v310 = vld [vmem:[%s272 + $0x68] sm:$0xff]
      %v311 = vld [vmem:[%s272 + $0x70] sm:$0xff]
      %v312 = vld [vmem:[%s272 + $0x78] sm:$0xff]
      %v313 = vld [vmem:[%s272 + $0x80] sm:$0xff]
      %v314 = vld [vmem:[%s272 + $0x88] sm:$0xff]
      %v315 = vld [vmem:[%s272 + $0x90] sm:$0xff]
      %v316 = vld [vmem:[%s272 + $0x98] sm:$0xff]
      %v317 = vld [vmem:[%s272 + $0xa0] sm:$0xff]
      %v318 = vld [vmem:[%s272 + $0xa8] sm:$0xff]
      %v319 = vld [vmem:[%s272 + $0xb0] sm:$0xff]
      %v320 = vld [vmem:[%s272 + $0xb8] sm:$0xff]
      %v321 = vld [vmem:[%s272 + $0xc0] sm:$0xff]
      %v322 = vld [vmem:[%s272 + $0xc8] sm:$0xff]
      %v323 = vld [vmem:[%s272 + $0xd0] sm:$0xff]
      %v324 = vld [vmem:[%s272 + $0xd8] sm:$0xff]
      %v325 = vld [vmem:[%s272 + $0xe0] sm:$0xff]
      %v326 = vld [vmem:[%s272 + $0xe8] sm:$0xff]
      %v327 = vld [vmem:[%s272 + $0xf0] sm:$0xff]
      %v328 = vld [vmem:[%s272 + $0xf8] sm:$0xff]
      %v329 = vld [vmem:[%s1] sm:$0xff]
      %v330 = vld [vmem:[%s1 + $0x8] sm:$0xff]
      %v331 = vld [vmem:[%s1 + $0x10] sm:$0xff]
      %v332 = vld [vmem:[%s1 + $0x18] sm:$0xff]
      %v333 = vld [vmem:[%s1 + $0x20] sm:$0xff]
      %v334 = vld [vmem:[%s1 + $0x28] sm:$0xff]
      %v335 = vld [vmem:[%s1 + $0x30] sm:$0xff]
      %v336 = vld [vmem:[%s1 + $0x38] sm:$0xff]
      %v337 = vld [vmem:[%s1 + $0x40] sm:$0xff]
      %v338 = vld [vmem:[%s1 + $0x48] sm:$0xff]
      %v339 = vld [vmem:[%s1 + $0x50] sm:$0xff]
      %v340 = vld [vmem:[%s1 + $0x58] sm:$0xff]
      %v341 = vld [vmem:[%s1 + $0x60] sm:$0xff]
      %v342 = vld [vmem:[%s1 + $0x68] sm:$0xff]
      %v343 = vld [vmem:[%s1 + $0x70] sm:$0xff]
      %v344 = vld [vmem:[%s1 + $0x78] sm:$0xff]
      %v345 = vld [vmem:[%s1 + $0x80] sm:$0xff]
      %v346 = vld [vmem:[%s1 + $0x88] sm:$0xff]
      %v347 = vld [vmem:[%s1 + $0x90] sm:$0xff]
      %v348 = vld [vmem:[%s1 + $0x98] sm:$0xff]
      %v349 = vld [vmem:[%s1 + $0xa0] sm:$0xff]
      %v350 = vld [vmem:[%s1 + $0xa8] sm:$0xff]
      %v351 = vld [vmem:[%s1 + $0xb0] sm:$0xff]
      %v352 = vld [vmem:[%s1 + $0xb8] sm:$0xff]
      %v353 = vld [vmem:[%s1 + $0xc0] sm:$0xff]
      %v354 = vld [vmem:[%s1 + $0xc8] sm:$0xff]
      %v355 = vld [vmem:[%s1 + $0xd0] sm:$0xff]
      %v356 = vld [vmem:[%s1 + $0xd8] sm:$0xff]
      %v357 = vld [vmem:[%s1 + $0xe0] sm:$0xff]
      %v358 = vld [vmem:[%s1 + $0xe8] sm:$0xff]
      %v359 = vld [vmem:[%s1 + $0xf0] sm:$0xff]
      %v360 = vld [vmem:[%s1 + $0xf8] sm:$0xff]
      %v361 = vld [vmem:[%s2] sm:$0xff]
      %v362 = vld [vmem:[%s2 + $0x8] sm:$0xff]
      %v363 = vld [vmem:[%s2 + $0x10] sm:$0xff]
      %v364 = vld [vmem:[%s2 + $0x18] sm:$0xff]
      %v365 = vld [vmem:[%s2 + $0x20] sm:$0xff]
      %v366 = vld [vmem:[%s2 + $0x28] sm:$0xff]
      %v367 = vld [vmem:[%s2 + $0x30] sm:$0xff]
      %v368 = vld [vmem:[%s2 + $0x38] sm:$0xff]
      %v369 = vld [vmem:[%s2 + $0x40] sm:$0xff]
      %v370 = vld [vmem:[%s2 + $0x48] sm:$0xff]
      %v371 = vld [vmem:[%s2 + $0x50] sm:$0xff]
      %v372 = vld [vmem:[%s2 + $0x58] sm:$0xff]
      %v373 = vld [vmem:[%s2 + $0x60] sm:$0xff]
      %v374 = vld [vmem:[%s2 + $0x68] sm:$0xff]
      %v375 = vld [vmem:[%s2 + $0x70] sm:$0xff]
      %v376 = vld [vmem:[%s2 + $0x78] sm:$0xff]
      %378 = vset.pattern.permute.xlu0 0
      %379 = vperm.xlu0 %378, %v361
      %v380 = vpop.permute.xlu0 %379
      %383 = vset.pattern.permute.xlu0 0
      %384 = vperm.xlu0 %383, %v362
      %v385 = vpop.permute.xlu0 %384
      %388 = vset.pattern.permute.xlu0 0
      %389 = vperm.xlu0 %388, %v363
      %v390 = vpop.permute.xlu0 %389
      %393 = vset.pattern.permute.xlu0 0
      %394 = vperm.xlu0 %393, %v364
      %v395 = vpop.permute.xlu0 %394
      %398 = vset.pattern.permute.xlu0 0
      %399 = vperm.xlu0 %398, %v365
      %v400 = vpop.permute.xlu0 %399
      %403 = vset.pattern.permute.xlu0 0
      %404 = vperm.xlu0 %403, %v366
      %v405 = vpop.permute.xlu0 %404
      %408 = vset.pattern.permute.xlu0 0
      %409 = vperm.xlu0 %408, %v367
      %v410 = vpop.permute.xlu0 %409
      %413 = vset.pattern.permute.xlu0 0
      %414 = vperm.xlu0 %413, %v368
      %v415 = vpop.permute.xlu0 %414
      %418 = vset.pattern.permute.xlu0 0
      %419 = vperm.xlu0 %418, %v369
      %v420 = vpop.permute.xlu0 %419
      %423 = vset.pattern.permute.xlu0 0
      %424 = vperm.xlu0 %423, %v370
      %v425 = vpop.permute.xlu0 %424
      %428 = vset.pattern.permute.xlu0 0
      %429 = vperm.xlu0 %428, %v371
      %v430 = vpop.permute.xlu0 %429
      %433 = vset.pattern.permute.xlu0 0
      %434 = vperm.xlu0 %433, %v372
      %v435 = vpop.permute.xlu0 %434
      %438 = vset.pattern.permute.xlu0 0
      %439 = vperm.xlu0 %438, %v373
      %v440 = vpop.permute.xlu0 %439
      %443 = vset.pattern.permute.xlu0 0
      %444 = vperm.xlu0 %443, %v374
      %v445 = vpop.permute.xlu0 %444
      %448 = vset.pattern.permute.xlu0 0
      %449 = vperm.xlu0 %448, %v375
      %v450 = vpop.permute.xlu0 %449
      %453 = vset.pattern.permute.xlu0 0
      %454 = vperm.xlu0 %453, %v376
      %v455 = vpop.permute.xlu0 %454
      %457 = vmatprep.subr.mxu0 0.0
      %458 = vmatpush1.msra.mxu0 %v297
      %459 = vmatprep.subr.mxu0 0.0
      %460 = vmatpush1.msra.mxu0 %v298
      %461 = vmatprep.subr.mxu0 0.0
      %462 = vmatpush1.msra.mxu0 %v299
      %463 = vmatprep.subr.mxu0 0.0
      %464 = vmatpush1.msra.mxu0 %v300
      %465 = vmatprep.subr.mxu0 0.0
      %466 = vmatpush1.msra.mxu0 %v301
      %467 = vmatprep.subr.mxu0 0.0
      %468 = vmatpush1.msra.mxu0 %v302
      %469 = vmatprep.subr.mxu0 0.0
      %470 = vmatpush1.msra.mxu0 %v303
      %471 = vmatprep.subr.mxu0 0.0
      %472 = vmatpush1.msra.mxu0 %v304
      %473 = vmatprep.subr.mxu0 0.0
      %474 = vmatpush1.msra.mxu0 %v305
      %475 = vmatprep.subr.mxu0 0.0
      %476 = vmatpush1.msra.mxu0 %v306
      %477 = vmatprep.subr.mxu0 0.0
      %478 = vmatpush1.msra.mxu0 %v307
      %479 = vmatprep.subr.mxu0 0.0
      %480 = vmatpush1.msra.mxu0 %v308
      %481 = vmatprep.subr.mxu0 0.0
      %482 = vmatpush1.msra.mxu0 %v309
      %483 = vmatprep.subr.mxu0 0.0
      %484 = vmatpush1.msra.mxu0 %v310
      %485 = vmatprep.subr.mxu0 0.0
      %486 = vmatpush1.msra.mxu0 %v311
      %487 = vmatprep.subr.mxu0 0.0
      %488 = vmatpush1.msra.mxu0 %v312
      %489 = vmatprep.subr.mxu0 0.0
      %490 = vmatpush1.msra.mxu0 %v313
      %491 = vmatprep.subr.mxu0 0.0
      %492 = vmatpush1.msra.mxu0 %v314
      %493 = vmatprep.subr.mxu0 0.0
      %494 = vmatpush1.msra.mxu0 %v315
      %495 = vmatprep.subr.mxu0 0.0
      %496 = vmatpush1.msra.mxu0 %v316
      %497 = vmatprep.subr.mxu0 0.0
      %498 = vmatpush1.msra.mxu0 %v317
      %499 = vmatprep.subr.mxu0 0.0
      %500 = vmatpush1.msra.mxu0 %v318
      %501 = vmatprep.subr.mxu0 0.0
      %502 = vmatpush1.msra.mxu0 %v319
      %503 = vmatprep.subr.mxu0 0.0
      %504 = vmatpush1.msra.mxu0 %v320
      %505 = vmatprep.subr.mxu0 0.0
      %506 = vmatpush1.msra.mxu0 %v321
      %507 = vmatprep.subr.mxu0 0.0
      %508 = vmatpush1.msra.mxu0 %v322
      %509 = vmatprep.subr.mxu0 0.0
      %510 = vmatpush1.msra.mxu0 %v323
      %511 = vmatprep.subr.mxu0 0.0
      %512 = vmatpush1.msra.mxu0 %v324
      %513 = vmatprep.subr.mxu0 0.0
      %514 = vmatpush1.msra.mxu0 %v325
      %515 = vmatprep.subr.mxu0 0.0
      %516 = vmatpush1.msra.mxu0 %v326
      %517 = vmatprep.subr.mxu0 0.0
      %518 = vmatpush1.msra.mxu0 %v327
      %519 = vmatprep.subr.mxu0 0.0
      %520 = vmatpush1.msra.mxu0 %v328
      %521 = vmatprep.mubr.f32.mxu0 %v330
      %522 = vmatmul.mubr.f32.gmra.mrb[0].mxu0 %v329
      %v523 = vpop.f32.mrb[0].mxu0
      %v524 = vadd.f32 %v380, %v523
      %v525 = vpop.f32.mrb[0].mxu0
      %526 = vmatprep.mubr.f32.mxu0 %v332
      %527 = vmatmul.mubr.f32.gmra.mrb[0].mxu0 %v331
      %v528 = vpop.f32.mrb[0].mxu0
      %v529 = vadd.f32 %v385, %v528
      %v530 = vpop.f32.mrb[0].mxu0
      %531 = vmatprep.mubr.f32.mxu0 %v334
      %532 = vmatmul.mubr.f32.gmra.mrb[0].mxu0 %v333
      %v533 = vpop.f32.mrb[0].mxu0
      %v534 = vadd.f32 %v390, %v533
      %v535 = vpop.f32.mrb[0].mxu0
      %536 = vmatprep.mubr.f32.mxu0 %v336
      %537 = vmatmul.mubr.f32.gmra.mrb[0].mxu0 %v335
      %v538 = vpop.f32.mrb[0].mxu0
      %v539 = vadd.f32 %v395, %v538
      %v540 = vpop.f32.mrb[0].mxu0
      %541 = vmatprep.mubr.f32.mxu0 %v338
      %542 = vmatmul.mubr.f32.gmra.mrb[0].mxu0 %v337
      %v543 = vpop.f32.mrb[0].mxu0
      %v544 = vadd.f32 %v400, %v543
      %v545 = vpop.f32.mrb[0].mxu0
      %546 = vmatprep.mubr.f32.mxu0 %v340
      %547 = vmatmul.mubr.f32.gmra.mrb[0].mxu0 %v339
      %v548 = vpop.f32.mrb[0].mxu0
      %v549 = vadd.f32 %v405, %v548
      %v550 = vpop.f32.mrb[0].mxu0
      %551 = vmatprep.mubr.f32.mxu0 %v342
      %552 = vmatmul.mubr.f32.gmra.mrb[0].mxu0 %v341
      %v553 = vpop.f32.mrb[0].mxu0
      %v554 = vadd.f32 %v410, %v553
      %v555 = vpop.f32.mrb[0].mxu0
      %556 = vmatprep.mubr.f32.mxu0 %v344
      %557 = vmatmul.mubr.f32.gmra.mrb[0].mxu0 %v343
      %v558 = vpop.f32.mrb[0].mxu0
      %v559 = vadd.f32 %v415, %v558
      %v560 = vpop.f32.mrb[0].mxu0
      %561 = vmatprep.mubr.f32.mxu0 %v346
      %562 = vmatmul.mubr.f32.gmra.mrb[0].mxu0 %v345
      %v563 = vpop.f32.mrb[0].mxu0
      %v564 = vadd.f32 %v420, %v563
      %v565 = vpop.f32.mrb[0].mxu0
      %566 = vmatprep.mubr.f32.mxu0 %v348
      %567 = vmatmul.mubr.f32.gmra.mrb[0].mxu0 %v347
      %v568 = vpop.f32.mrb[0].mxu0
      %v569 = vadd.f32 %v425, %v568
      %v570 = vpop.f32.mrb[0].mxu0
      %571 = vmatprep.mubr.f32.mxu0 %v350
      %572 = vmatmul.mubr.f32.gmra.mrb[0].mxu0 %v349
      %v573 = vpop.f32.mrb[0].mxu0
      %v574 = vadd.f32 %v430, %v573
      %v575 = vpop.f32.mrb[0].mxu0
      %576 = vmatprep.mubr.f32.mxu0 %v352
      %577 = vmatmul.mubr.f32.gmra.mrb[0].mxu0 %v351
      %v578 = vpop.f32.mrb[0].mxu0
      %v579 = vadd.f32 %v435, %v578
      %v580 = vpop.f32.mrb[0].mxu0
      %581 = vmatprep.mubr.f32.mxu0 %v354
      %582 = vmatmul.mubr.f32.gmra.mrb[0].mxu0 %v353
      %v583 = vpop.f32.mrb[0].mxu0
      %v584 = vadd.f32 %v440, %v583
      %v585 = vpop.f32.mrb[0].mxu0
      %586 = vmatprep.mubr.f32.mxu0 %v356
      %587 = vmatmul.mubr.f32.gmra.mrb[0].mxu0 %v355
      %v588 = vpop.f32.mrb[0].mxu0
      %v589 = vadd.f32 %v445, %v588
      %v590 = vpop.f32.mrb[0].mxu0
      %591 = vmatprep.mubr.f32.mxu0 %v358
      %592 = vmatmul.mubr.f32.gmra.mrb[0].mxu0 %v357
      %v593 = vpop.f32.mrb[0].mxu0
      %v594 = vadd.f32 %v450, %v593
      %v595 = vpop.f32.mrb[0].mxu0
      %596 = vmatprep.mubr.f32.mxu0 %v360
      %597 = vmatmul.mubr.f32.gmra.mrb[0].mxu0 %v359
      %v598 = vpop.f32.mrb[0].mxu0
      %v599 = vadd.f32 %v455, %v598
      %v600 = vpop.f32.mrb[0].mxu0
      %601 = vdwg.mxu0
      %602 = vst [vmem:[%s280] sm:$0xff] %v524
      %603 = vst [vmem:[%s280 + $0x8] sm:$0xff] %v529
      %604 = vst [vmem:[%s280 + $0x10] sm:$0xff] %v534
      %605 = vst [vmem:[%s280 + $0x18] sm:$0xff] %v539
      %606 = vst [vmem:[%s280 + $0x20] sm:$0xff] %v544
      %607 = vst [vmem:[%s280 + $0x28] sm:$0xff] %v549
      %608 = vst [vmem:[%s280 + $0x30] sm:$0xff] %v554
      %609 = vst [vmem:[%s280 + $0x38] sm:$0xff] %v559
      %610 = vst [vmem:[%s280 + $0x40] sm:$0xff] %v564
      %611 = vst [vmem:[%s280 + $0x48] sm:$0xff] %v569
      %612 = vst [vmem:[%s280 + $0x50] sm:$0xff] %v574
      %613 = vst [vmem:[%s280 + $0x58] sm:$0xff] %v579
      %614 = vst [vmem:[%s280 + $0x60] sm:$0xff] %v584
      %615 = vst [vmem:[%s280 + $0x68] sm:$0xff] %v589
      %616 = vst [vmem:[%s280 + $0x70] sm:$0xff] %v594
      %617 = vst [vmem:[%s280 + $0x78] sm:$0xff] %v599
      %v618 = vld [vmem:[%s1 + $0x100] sm:$0xff]
      %v619 = vld [vmem:[%s1 + $0x108] sm:$0xff]
      %v620 = vld [vmem:[%s1 + $0x110] sm:$0xff]
      %v621 = vld [vmem:[%s1 + $0x118] sm:$0xff]
      %v622 = vld [vmem:[%s1 + $0x120] sm:$0xff]
      %v623 = vld [vmem:[%s1 + $0x128] sm:$0xff]
      %v624 = vld [vmem:[%s1 + $0x130] sm:$0xff]
      %v625 = vld [vmem:[%s1 + $0x138] sm:$0xff]
      %v626 = vld [vmem:[%s1 + $0x140] sm:$0xff]
      %v627 = vld [vmem:[%s1 + $0x148] sm:$0xff]
      %v628 = vld [vmem:[%s1 + $0x150] sm:$0xff]
      %v629 = vld [vmem:[%s1 + $0x158] sm:$0xff]
      %v630 = vld [vmem:[%s1 + $0x160] sm:$0xff]
      %v631 = vld [vmem:[%s1 + $0x168] sm:$0xff]
      %v632 = vld [vmem:[%s1 + $0x170] sm:$0xff]
      %v633 = vld [vmem:[%s1 + $0x178] sm:$0xff]
      %v634 = vld [vmem:[%s1 + $0x180] sm:$0xff]
      %v635 = vld [vmem:[%s1 + $0x188] sm:$0xff]
      %v636 = vld [vmem:[%s1 + $0x190] sm:$0xff]
      %v637 = vld [vmem:[%s1 + $0x198] sm:$0xff]
      %v638 = vld [vmem:[%s1 + $0x1a0] sm:$0xff]
      %v639 = vld [vmem:[%s1 + $0x1a8] sm:$0xff]
      %v640 = vld [vmem:[%s1 + $0x1b0] sm:$0xff]
      %v641 = vld [vmem:[%s1 + $0x1b8] sm:$0xff]
      %v642 = vld [vmem:[%s1 + $0x1c0] sm:$0xff]
      %v643 = vld [vmem:[%s1 + $0x1c8] sm:$0xff]
      %v644 = vld [vmem:[%s1 + $0x1d0] sm:$0xff]
      %v645 = vld [vmem:[%s1 + $0x1d8] sm:$0xff]
      %v646 = vld [vmem:[%s1 + $0x1e0] sm:$0xff]
      %v647 = vld [vmem:[%s1 + $0x1e8] sm:$0xff]
      %v648 = vld [vmem:[%s1 + $0x1f0] sm:$0xff]
      %v649 = vld [vmem:[%s1 + $0x1f8] sm:$0xff]
      %v650 = vld [vmem:[%s1 + $0x200] sm:$0xff]
      %v651 = vld [vmem:[%s1 + $0x208] sm:$0xff]
      %v652 = vld [vmem:[%s1 + $0x210] sm:$0xff]
      %v653 = vld [vmem:[%s1 + $0x218] sm:$0xff]
      %v654 = vld [vmem:[%s1 + $0x220] sm:$0xff]
      %v655 = vld [vmem:[%s1 + $0x228] sm:$0xff]
      %v656 = vld [vmem:[%s1 + $0x230] sm:$0xff]
      %v657 = vld [vmem:[%s1 + $0x238] sm:$0xff]
      %v658 = vld [vmem:[%s1 + $0x240] sm:$0xff]
      %v659 = vld [vmem:[%s1 + $0x248] sm:$0xff]
      %v660 = vld [vmem:[%s1 + $0x250] sm:$0xff]
      %v661 = vld [vmem:[%s1 + $0x258] sm:$0xff]
      %v662 = vld [vmem:[%s1 + $0x260] sm:$0xff]
      %v663 = vld [vmem:[%s1 + $0x268] sm:$0xff]
      %v664 = vld [vmem:[%s1 + $0x270] sm:$0xff]
      %v665 = vld [vmem:[%s1 + $0x278] sm:$0xff]
      %v666 = vld [vmem:[%s1 + $0x280] sm:$0xff]
      %v667 = vld [vmem:[%s1 + $0x288] sm:$0xff]
      %v668 = vld [vmem:[%s1 + $0x290] sm:$0xff]
      %v669 = vld [vmem:[%s1 + $0x298] sm:$0xff]
      %v670 = vld [vmem:[%s1 + $0x2a0] sm:$0xff]
      %v671 = vld [vmem:[%s1 + $0x2a8] sm:$0xff]
      %v672 = vld [vmem:[%s1 + $0x2b0] sm:$0xff]
      %v673 = vld [vmem:[%s1 + $0x2b8] sm:$0xff]
      %v674 = vld [vmem:[%s1 + $0x2c0] sm:$0xff]
      %v675 = vld [vmem:[%s1 + $0x2c8] sm:$0xff]
      %v676 = vld [vmem:[%s1 + $0x2d0] sm:$0xff]
      %v677 = vld [vmem:[%s1 + $0x2d8] sm:$0xff]
      %v678 = vld [vmem:[%s1 + $0x2e0] sm:$0xff]
      %v679 = vld [vmem:[%s1 + $0x2e8] sm:$0xff]
      %v680 = vld [vmem:[%s1 + $0x2f0] sm:$0xff]
      %v681 = vld [vmem:[%s1 + $0x2f8] sm:$0xff]
      %v682 = vld [vmem:[%s2 + $0x80] sm:$0xff]
      %v683 = vld [vmem:[%s2 + $0x88] sm:$0xff]
      %v684 = vld [vmem:[%s2 + $0x90] sm:$0xff]
      %v685 = vld [vmem:[%s2 + $0x98] sm:$0xff]
      %v686 = vld [vmem:[%s2 + $0xa0] sm:$0xff]
      %v687 = vld [vmem:[%s2 + $0xa8] sm:$0xff]
      %v688 = vld [vmem:[%s2 + $0xb0] sm:$0xff]
      %v689 = vld [vmem:[%s2 + $0xb8] sm:$0xff]
      %v690 = vld [vmem:[%s2 + $0xc0] sm:$0xff]
      %v691 = vld [vmem:[%s2 + $0xc8] sm:$0xff]
      %v692 = vld [vmem:[%s2 + $0xd0] sm:$0xff]
      %v693 = vld [vmem:[%s2 + $0xd8] sm:$0xff]
      %v694 = vld [vmem:[%s2 + $0xe0] sm:$0xff]
      %v695 = vld [vmem:[%s2 + $0xe8] sm:$0xff]
      %v696 = vld [vmem:[%s2 + $0xf0] sm:$0xff]
      %v697 = vld [vmem:[%s2 + $0xf8] sm:$0xff]
      %v698 = vld [vmem:[%s2 + $0x100] sm:$0xff]
      %v699 = vld [vmem:[%s2 + $0x108] sm:$0xff]
      %v700 = vld [vmem:[%s2 + $0x110] sm:$0xff]
      %v701 = vld [vmem:[%s2 + $0x118] sm:$0xff]
      %v702 = vld [vmem:[%s2 + $0x120] sm:$0xff]
      %v703 = vld [vmem:[%s2 + $0x128] sm:$0xff]
      %v704 = vld [vmem:[%s2 + $0x130] sm:$0xff]
      %v705 = vld [vmem:[%s2 + $0x138] sm:$0xff]
      %v706 = vld [vmem:[%s2 + $0x140] sm:$0xff]
      %v707 = vld [vmem:[%s2 + $0x148] sm:$0xff]
      %v708 = vld [vmem:[%s2 + $0x150] sm:$0xff]
      %v709 = vld [vmem:[%s2 + $0x158] sm:$0xff]
      %v710 = vld [vmem:[%s2 + $0x160] sm:$0xff]
      %v711 = vld [vmem:[%s2 + $0x168] sm:$0xff]
      %v712 = vld [vmem:[%s2 + $0x170] sm:$0xff]
      %v713 = vld [vmem:[%s2 + $0x178] sm:$0xff]
      %715 = vset.pattern.permute.xlu0 0
      %716 = vperm.xlu0 %715, %v682
      %v717 = vpop.permute.xlu0 %716
      %720 = vset.pattern.permute.xlu0 0
      %721 = vperm.xlu0 %720, %v683
      %v722 = vpop.permute.xlu0 %721
      %725 = vset.pattern.permute.xlu0 0
      %726 = vperm.xlu0 %725, %v684
      %v727 = vpop.permute.xlu0 %726
      %730 = vset.pattern.permute.xlu0 0
      %731 = vperm.xlu0 %730, %v685
      %v732 = vpop.permute.xlu0 %731
      %735 = vset.pattern.permute.xlu0 0
      %736 = vperm.xlu0 %735, %v686
      %v737 = vpop.permute.xlu0 %736
      %740 = vset.pattern.permute.xlu0 0
      %741 = vperm.xlu0 %740, %v687
      %v742 = vpop.permute.xlu0 %741
      %745 = vset.pattern.permute.xlu0 0
      %746 = vperm.xlu0 %745, %v688
      %v747 = vpop.permute.xlu0 %746
      %750 = vset.pattern.permute.xlu0 0
      %751 = vperm.xlu0 %750, %v689
      %v752 = vpop.permute.xlu0 %751
      %755 = vset.pattern.permute.xlu0 0
      %756 = vperm.xlu0 %755, %v690
      %v757 = vpop.permute.xlu0 %756
      %760 = vset.pattern.permute.xlu0 0
      %761 = vperm.xlu0 %760, %v691
      %v762 = vpop.permute.xlu0 %761
      %765 = vset.pattern.permute.xlu0 0
      %766 = vperm.xlu0 %765, %v692
      %v767 = vpop.permute.xlu0 %766
      %770 = vset.pattern.permute.xlu0 0
      %771 = vperm.xlu0 %770, %v693
      %v772 = vpop.permute.xlu0 %771
      %775 = vset.pattern.permute.xlu0 0
      %776 = vperm.xlu0 %775, %v694
      %v777 = vpop.permute.xlu0 %776
      %780 = vset.pattern.permute.xlu0 0
      %781 = vperm.xlu0 %780, %v695
      %v782 = vpop.permute.xlu0 %781
      %785 = vset.pattern.permute.xlu0 0
      %786 = vperm.xlu0 %785, %v696
      %v787 = vpop.permute.xlu0 %786
      %790 = vset.pattern.permute.xlu0 0
      %791 = vperm.xlu0 %790, %v697
      %v792 = vpop.permute.xlu0 %791
      %795 = vset.pattern.permute.xlu0 0
      %796 = vperm.xlu0 %795, %v698
      %v797 = vpop.permute.xlu0 %796
      %800 = vset.pattern.permute.xlu0 0
      %801 = vperm.xlu0 %800, %v699
      %v802 = vpop.permute.xlu0 %801
      %805 = vset.pattern.permute.xlu0 0
      %806 = vperm.xlu0 %805, %v700
      %v807 = vpop.permute.xlu0 %806
      %810 = vset.pattern.permute.xlu0 0
      %811 = vperm.xlu0 %810, %v701
      %v812 = vpop.permute.xlu0 %811
      %815 = vset.pattern.permute.xlu0 0
      %816 = vperm.xlu0 %815, %v702
      %v817 = vpop.permute.xlu0 %816
      %820 = vset.pattern.permute.xlu0 0
      %821 = vperm.xlu0 %820, %v703
      %v822 = vpop.permute.xlu0 %821
      %825 = vset.pattern.permute.xlu0 0
      %826 = vperm.xlu0 %825, %v704
      %v827 = vpop.permute.xlu0 %826
      %830 = vset.pattern.permute.xlu0 0
      %831 = vperm.xlu0 %830, %v705
      %v832 = vpop.permute.xlu0 %831
      %835 = vset.pattern.permute.xlu0 0
      %836 = vperm.xlu0 %835, %v706
      %v837 = vpop.permute.xlu0 %836
      %840 = vset.pattern.permute.xlu0 0
      %841 = vperm.xlu0 %840, %v707
      %v842 = vpop.permute.xlu0 %841
      %845 = vset.pattern.permute.xlu0 0
      %846 = vperm.xlu0 %845, %v708
      %v847 = vpop.permute.xlu0 %846
      %850 = vset.pattern.permute.xlu0 0
      %851 = vperm.xlu0 %850, %v709
      %v852 = vpop.permute.xlu0 %851
      %855 = vset.pattern.permute.xlu0 0
      %856 = vperm.xlu0 %855, %v710
      %v857 = vpop.permute.xlu0 %856
      %860 = vset.pattern.permute.xlu0 0
      %861 = vperm.xlu0 %860, %v711
      %v862 = vpop.permute.xlu0 %861
      %865 = vset.pattern.permute.xlu0 0
      %866 = vperm.xlu0 %865, %v712
      %v867 = vpop.permute.xlu0 %866
      %870 = vset.pattern.permute.xlu0 0
      %871 = vperm.xlu0 %870, %v713
      %v872 = vpop.permute.xlu0 %871
      %874 = vmatprep.subr.mxu0 0.0
      %875 = vmatpush1.msra.mxu0 %v297
      %876 = vmatprep.subr.mxu0 0.0
      %877 = vmatpush1.msra.mxu0 %v298
      %878 = vmatprep.subr.mxu0 0.0
      %879 = vmatpush1.msra.mxu0 %v299
      %880 = vmatprep.subr.mxu0 0.0
      %881 = vmatpush1.msra.mxu0 %v300
      %882 = vmatprep.subr.mxu0 0.0
      %883 = vmatpush1.msra.mxu0 %v301
      %884 = vmatprep.subr.mxu0 0.0
      %885 = vmatpush1.msra.mxu0 %v302
      %886 = vmatprep.subr.mxu0 0.0
      %887 = vmatpush1.msra.mxu0 %v303
      %888 = vmatprep.subr.mxu0 0.0
      %889 = vmatpush1.msra.mxu0 %v304
      %890 = vmatprep.subr.mxu0 0.0
      %891 = vmatpush1.msra.mxu0 %v305
      %892 = vmatprep.subr.mxu0 0.0
      %893 = vmatpush1.msra.mxu0 %v306
      %894 = vmatprep.subr.mxu0 0.0
      %895 = vmatpush1.msra.mxu0 %v307
      %896 = vmatprep.subr.mxu0 0.0
      %897 = vmatpush1.msra.mxu0 %v308
      %898 = vmatprep.subr.mxu0 0.0
      %899 = vmatpush1.msra.mxu0 %v309
      %900 = vmatprep.subr.mxu0 0.0
      %901 = vmatpush1.msra.mxu0 %v310
      %902 = vmatprep.subr.mxu0 0.0
      %903 = vmatpush1.msra.mxu0 %v311
      %904 = vmatprep.subr.mxu0 0.0
      %905 = vmatpush1.msra.mxu0 %v312
      %906 = vmatprep.subr.mxu0 0.0
      %907 = vmatpush1.msra.mxu0 %v313
      %908 = vmatprep.subr.mxu0 0.0
      %909 = vmatpush1.msra.mxu0 %v314
      %910 = vmatprep.subr.mxu0 0.0
      %911 = vmatpush1.msra.mxu0 %v315
      %912 = vmatprep.subr.mxu0 0.0
      %913 = vmatpush1.msra.mxu0 %v316
      %914 = vmatprep.subr.mxu0 0.0
      %915 = vmatpush1.msra.mxu0 %v317
      %916 = vmatprep.subr.mxu0 0.0
      %917 = vmatpush1.msra.mxu0 %v318
      %918 = vmatprep.subr.mxu0 0.0
      %919 = vmatpush1.msra.mxu0 %v319
      %920 = vmatprep.subr.mxu0 0.0
      %921 = vmatpush1.msra.mxu0 %v320
      %922 = vmatprep.subr.mxu0 0.0
      %923 = vmatpush1.msra.mxu0 %v321
      %924 = vmatprep.subr.mxu0 0.0
      %925 = vmatpush1.msra.mxu0 %v322
      %926 = vmatprep.subr.mxu0 0.0
      %927 = vmatpush1.msra.mxu0 %v323
      %928 = vmatprep.subr.mxu0 0.0
      %929 = vmatpush1.msra.mxu0 %v324
      %930 = vmatprep.subr.mxu0 0.0
      %931 = vmatpush1.msra.mxu0 %v325
      %932 = vmatprep.subr.mxu0 0.0
      %933 = vmatpush1.msra.mxu0 %v326
      %934 = vmatprep.subr.mxu0 0.0
      %935 = vmatpush1.msra.mxu0 %v327
      %936 = vmatprep.subr.mxu0 0.0
      %937 = vmatpush1.msra.mxu0 %v328
      %938 = vmatprep.mubr.f32.mxu0 %v619
      %939 = vmatmul.mubr.f32.gmra.mrb[0].mxu0 %v618
      %v940 = vpop.f32.mrb[0].mxu0
      %v941 = vadd.f32 %v717, %v940
      %v942 = vpop.f32.mrb[0].mxu0
      %943 = vmatprep.mubr.f32.mxu0 %v621
      %944 = vmatmul.mubr.f32.gmra.mrb[0].mxu0 %v620
      %v945 = vpop.f32.mrb[0].mxu0
      %v946 = vadd.f32 %v722, %v945
      %v947 = vpop.f32.mrb[0].mxu0
      %948 = vmatprep.mubr.f32.mxu0 %v623
      %949 = vmatmul.mubr.f32.gmra.mrb[0].mxu0 %v622
      %v950 = vpop.f32.mrb[0].mxu0
      %v951 = vadd.f32 %v727, %v950
      %v952 = vpop.f32.mrb[0].mxu0
      %953 = vmatprep.mubr.f32.mxu0 %v625
      %954 = vmatmul.mubr.f32.gmra.mrb[0].mxu0 %v624
      %v955 = vpop.f32.mrb[0].mxu0
      %v956 = vadd.f32 %v732, %v955
      %v957 = vpop.f32.mrb[0].mxu0
      %958 = vmatprep.mubr.f32.mxu0 %v627
      %959 = vmatmul.mubr.f32.gmra.mrb[0].mxu0 %v626
      %v960 = vpop.f32.mrb[0].mxu0
      %v961 = vadd.f32 %v737, %v960
      %v962 = vpop.f32.mrb[0].mxu0
      %963 = vmatprep.mubr.f32.mxu0 %v629
      %964 = vmatmul.mubr.f32.gmra.mrb[0].mxu0 %v628
      %v965 = vpop.f32.mrb[0].mxu0
      %v966 = vadd.f32 %v742, %v965
      %v967 = vpop.f32.mrb[0].mxu0
      %968 = vmatprep.mubr.f32.mxu0 %v631
      %969 = vmatmul.mubr.f32.gmra.mrb[0].mxu0 %v630
      %v970 = vpop.f32.mrb[0].mxu0
      %v971 = vadd.f32 %v747, %v970
      %v972 = vpop.f32.mrb[0].mxu0
      %973 = vmatprep.mubr.f32.mxu0 %v633
      %974 = vmatmul.mubr.f32.gmra.mrb[0].mxu0 %v632
      %v975 = vpop.f32.mrb[0].mxu0
      %v976 = vadd.f32 %v752, %v975
      %v977 = vpop.f32.mrb[0].mxu0
      %978 = vmatprep.mubr.f32.mxu0 %v635
      %979 = vmatmul.mubr.f32.gmra.mrb[0].mxu0 %v634
      %v980 = vpop.f32.mrb[0].mxu0
      %v981 = vadd.f32 %v757, %v980
      %v982 = vpop.f32.mrb[0].mxu0
      %983 = vmatprep.mubr.f32.mxu0 %v637
      %984 = vmatmul.mubr.f32.gmra.mrb[0].mxu0 %v636
      %v985 = vpop.f32.mrb[0].mxu0
      %v986 = vadd.f32 %v762, %v985
      %v987 = vpop.f32.mrb[0].mxu0
      %988 = vmatprep.mubr.f32.mxu0 %v639
      %989 = vmatmul.mubr.f32.gmra.mrb[0].mxu0 %v638
      %v990 = vpop.f32.mrb[0].mxu0
      %v991 = vadd.f32 %v767, %v990
      %v992 = vpop.f32.mrb[0].mxu0
      %993 = vmatprep.mubr.f32.mxu0 %v641
      %994 = vmatmul.mubr.f32.gmra.mrb[0].mxu0 %v640
      %v995 = vpop.f32.mrb[0].mxu0
      %v996 = vadd.f32 %v772, %v995
      %v997 = vpop.f32.mrb[0].mxu0
      %998 = vmatprep.mubr.f32.mxu0 %v643
      %999 = vmatmul.mubr.f32.gmra.mrb[0].mxu0 %v642
      %v1000 = vpop.f32.mrb[0].mxu0
      %v1001 = vadd.f32 %v777, %v1000
      %v1002 = vpop.f32.mrb[0].mxu0
      %1003 = vmatprep.mubr.f32.mxu0 %v645
      %1004 = vmatmul.mubr.f32.gmra.mrb[0].mxu0 %v644
      %v1005 = vpop.f32.mrb[0].mxu0
      %v1006 = vadd.f32 %v782, %v1005
      %v1007 = vpop.f32.mrb[0].mxu0
      %1008 = vmatprep.mubr.f32.mxu0 %v647
      %1009 = vmatmul.mubr.f32.gmra.mrb[0].mxu0 %v646
      %v1010 = vpop.f32.mrb[0].mxu0
      %v1011 = vadd.f32 %v787, %v1010
      %v1012 = vpop.f32.mrb[0].mxu0
      %1013 = vmatprep.mubr.f32.mxu0 %v649
      %1014 = vmatmul.mubr.f32.gmra.mrb[0].mxu0 %v648
      %v1015 = vpop.f32.mrb[0].mxu0
      %v1016 = vadd.f32 %v792, %v1015
      %v1017 = vpop.f32.mrb[0].mxu0
      %1018 = vmatprep.mubr.f32.mxu0 %v651
      %1019 = vmatmul.mubr.f32.gmra.mrb[0].mxu0 %v650
      %v1020 = vpop.f32.mrb[0].mxu0
      %v1021 = vadd.f32 %v797, %v1020
      %v1022 = vpop.f32.mrb[0].mxu0
      %1023 = vmatprep.mubr.f32.mxu0 %v653
      %1024 = vmatmul.mubr.f32.gmra.mrb[0].mxu0 %v652
      %v1025 = vpop.f32.mrb[0].mxu0
      %v1026 = vadd.f32 %v802, %v1025
      %v1027 = vpop.f32.mrb[0].mxu0
      %1028 = vmatprep.mubr.f32.mxu0 %v655
      %1029 = vmatmul.mubr.f32.gmra.mrb[0].mxu0 %v654
      %v1030 = vpop.f32.mrb[0].mxu0
      %v1031 = vadd.f32 %v807, %v1030
      %v1032 = vpop.f32.mrb[0].mxu0
      %1033 = vmatprep.mubr.f32.mxu0 %v657
      %1034 = vmatmul.mubr.f32.gmra.mrb[0].mxu0 %v656
      %v1035 = vpop.f32.mrb[0].mxu0
      %v1036 = vadd.f32 %v812, %v1035
      %v1037 = vpop.f32.mrb[0].mxu0
      %1038 = vmatprep.mubr.f32.mxu0 %v659
      %1039 = vmatmul.mubr.f32.gmra.mrb[0].mxu0 %v658
      %v1040 = vpop.f32.mrb[0].mxu0
      %v1041 = vadd.f32 %v817, %v1040
      %v1042 = vpop.f32.mrb[0].mxu0
      %1043 = vmatprep.mubr.f32.mxu0 %v661
      %1044 = vmatmul.mubr.f32.gmra.mrb[0].mxu0 %v660
      %v1045 = vpop.f32.mrb[0].mxu0
      %v1046 = vadd.f32 %v822, %v1045
      %v1047 = vpop.f32.mrb[0].mxu0
      %1048 = vmatprep.mubr.f32.mxu0 %v663
      %1049 = vmatmul.mubr.f32.gmra.mrb[0].mxu0 %v662
      %v1050 = vpop.f32.mrb[0].mxu0
      %v1051 = vadd.f32 %v827, %v1050
      %v1052 = vpop.f32.mrb[0].mxu0
      %1053 = vmatprep.mubr.f32.mxu0 %v665
      %1054 = vmatmul.mubr.f32.gmra.mrb[0].mxu0 %v664
      %v1055 = vpop.f32.mrb[0].mxu0
      %v1056 = vadd.f32 %v832, %v1055
      %v1057 = vpop.f32.mrb[0].mxu0
      %1058 = vmatprep.mubr.f32.mxu0 %v667
      %1059 = vmatmul.mubr.f32.gmra.mrb[0].mxu0 %v666
      %v1060 = vpop.f32.mrb[0].mxu0
      %v1061 = vadd.f32 %v837, %v1060
      %v1062 = vpop.f32.mrb[0].mxu0
      %1063 = vmatprep.mubr.f32.mxu0 %v669
      %1064 = vmatmul.mubr.f32.gmra.mrb[0].mxu0 %v668
      %v1065 = vpop.f32.mrb[0].mxu0
      %v1066 = vadd.f32 %v842, %v1065
      %v1067 = vpop.f32.mrb[0].mxu0
      %1068 = vmatprep.mubr.f32.mxu0 %v671
      %1069 = vmatmul.mubr.f32.gmra.mrb[0].mxu0 %v670
      %v1070 = vpop.f32.mrb[0].mxu0
      %v1071 = vadd.f32 %v847, %v1070
      %v1072 = vpop.f32.mrb[0].mxu0
      %1073 = vmatprep.mubr.f32.mxu0 %v673
      %1074 = vmatmul.mubr.f32.gmra.mrb[0].mxu0 %v672
      %v1075 = vpop.f32.mrb[0].mxu0
      %v1076 = vadd.f32 %v852, %v1075
      %v1077 = vpop.f32.mrb[0].mxu0
      %1078 = vmatprep.mubr.f32.mxu0 %v675
      %1079 = vmatmul.mubr.f32.gmra.mrb[0].mxu0 %v674
      %v1080 = vpop.f32.mrb[0].mxu0
      %v1081 = vadd.f32 %v857, %v1080
      %v1082 = vpop.f32.mrb[0].mxu0
      %1083 = vmatprep.mubr.f32.mxu0 %v677
      %1084 = vmatmul.mubr.f32.gmra.mrb[0].mxu0 %v676
      %v1085 = vpop.f32.mrb[0].mxu0
      %v1086 = vadd.f32 %v862, %v1085
      %v1087 = vpop.f32.mrb[0].mxu0
      %1088 = vmatprep.mubr.f32.mxu0 %v679
      %1089 = vmatmul.mubr.f32.gmra.mrb[0].mxu0 %v678
      %v1090 = vpop.f32.mrb[0].mxu0
      %v1091 = vadd.f32 %v867, %v1090
      %v1092 = vpop.f32.mrb[0].mxu0
      %1093 = vmatprep.mubr.f32.mxu0 %v681
      %1094 = vmatmul.mubr.f32.gmra.mrb[0].mxu0 %v680
      %v1095 = vpop.f32.mrb[0].mxu0
      %v1096 = vadd.f32 %v872, %v1095
      %v1097 = vpop.f32.mrb[0].mxu0
      %1098 = vdwg.mxu0
      %1099 = vst [vmem:[%s288] sm:$0xff] %v941
      %1100 = vst [vmem:[%s288 + $0x8] sm:$0xff] %v946
      %1101 = vst [vmem:[%s288 + $0x10] sm:$0xff] %v951
      %1102 = vst [vmem:[%s288 + $0x18] sm:$0xff] %v956
      %1103 = vst [vmem:[%s288 + $0x20] sm:$0xff] %v961
      %1104 = vst [vmem:[%s288 + $0x28] sm:$0xff] %v966
      %1105 = vst [vmem:[%s288 + $0x30] sm:$0xff] %v971
      %1106 = vst [vmem:[%s288 + $0x38] sm:$0xff] %v976
      %1107 = vst [vmem:[%s288 + $0x40] sm:$0xff] %v981
      %1108 = vst [vmem:[%s288 + $0x48] sm:$0xff] %v986
      %1109 = vst [vmem:[%s288 + $0x50] sm:$0xff] %v991
      %1110 = vst [vmem:[%s288 + $0x58] sm:$0xff] %v996
      %1111 = vst [vmem:[%s288 + $0x60] sm:$0xff] %v1001
      %1112 = vst [vmem:[%s288 + $0x68] sm:$0xff] %v1006
      %1113 = vst [vmem:[%s288 + $0x70] sm:$0xff] %v1011
      %1114 = vst [vmem:[%s288 + $0x78] sm:$0xff] %v1016
      %1115 = vst [vmem:[%s288 + $0x80] sm:$0xff] %v1021
      %1116 = vst [vmem:[%s288 + $0x88] sm:$0xff] %v1026
      %1117 = vst [vmem:[%s288 + $0x90] sm:$0xff] %v1031
      %1118 = vst [vmem:[%s288 + $0x98] sm:$0xff] %v1036
      %1119 = vst [vmem:[%s288 + $0xa0] sm:$0xff] %v1041
      %1120 = vst [vmem:[%s288 + $0xa8] sm:$0xff] %v1046
      %1121 = vst [vmem:[%s288 + $0xb0] sm:$0xff] %v1051
      %1122 = vst [vmem:[%s288 + $0xb8] sm:$0xff] %v1056
      %1123 = vst [vmem:[%s288 + $0xc0] sm:$0xff] %v1061
      %1124 = vst [vmem:[%s288 + $0xc8] sm:$0xff] %v1066
      %1125 = vst [vmem:[%s288 + $0xd0] sm:$0xff] %v1071
      %1126 = vst [vmem:[%s288 + $0xd8] sm:$0xff] %v1076
      %1127 = vst [vmem:[%s288 + $0xe0] sm:$0xff] %v1081
      %1128 = vst [vmem:[%s288 + $0xe8] sm:$0xff] %v1086
      %1129 = vst [vmem:[%s288 + $0xf0] sm:$0xff] %v1091
      %1130 = vst [vmem:[%s288 + $0xf8] sm:$0xff] %v1096
      %v1131 = vld [vmem:[%s1 + $0x300] sm:$0xff]
      %v1132 = vld [vmem:[%s1 + $0x308] sm:$0xff]
      %v1133 = vld [vmem:[%s1 + $0x310] sm:$0xff]
      %v1134 = vld [vmem:[%s1 + $0x318] sm:$0xff]
      %v1135 = vld [vmem:[%s1 + $0x320] sm:$0xff]
      %v1136 = vld [vmem:[%s1 + $0x328] sm:$0xff]
      %v1137 = vld [vmem:[%s1 + $0x330] sm:$0xff]
      %v1138 = vld [vmem:[%s1 + $0x338] sm:$0xff]
      %v1139 = vld [vmem:[%s1 + $0x340] sm:$0xff]
      %v1140 = vld [vmem:[%s1 + $0x348] sm:$0xff]
      %v1141 = vld [vmem:[%s1 + $0x350] sm:$0xff]
      %v1142 = vld [vmem:[%s1 + $0x358] sm:$0xff]
      %v1143 = vld [vmem:[%s1 + $0x360] sm:$0xff]
      %v1144 = vld [vmem:[%s1 + $0x368] sm:$0xff]
      %v1145 = vld [vmem:[%s1 + $0x370] sm:$0xff]
      %v1146 = vld [vmem:[%s1 + $0x378] sm:$0xff]
      %v1147 = vld [vmem:[%s1 + $0x380] sm:$0xff]
      %v1148 = vld [vmem:[%s1 + $0x388] sm:$0xff]
      %v1149 = vld [vmem:[%s1 + $0x390] sm:$0xff]
      %v1150 = vld [vmem:[%s1 + $0x398] sm:$0xff]
      %v1151 = vld [vmem:[%s1 + $0x3a0] sm:$0xff]
      %v1152 = vld [vmem:[%s1 + $0x3a8] sm:$0xff]
      %v1153 = vld [vmem:[%s1 + $0x3b0] sm:$0xff]
      %v1154 = vld [vmem:[%s1 + $0x3b8] sm:$0xff]
      %v1155 = vld [vmem:[%s1 + $0x3c0] sm:$0xff]
      %v1156 = vld [vmem:[%s1 + $0x3c8] sm:$0xff]
      %v1157 = vld [vmem:[%s1 + $0x3d0] sm:$0xff]
      %v1158 = vld [vmem:[%s1 + $0x3d8] sm:$0xff]
      %v1159 = vld [vmem:[%s1 + $0x3e0] sm:$0xff]
      %v1160 = vld [vmem:[%s1 + $0x3e8] sm:$0xff]
      %v1161 = vld [vmem:[%s1 + $0x3f0] sm:$0xff]
      %v1162 = vld [vmem:[%s1 + $0x3f8] sm:$0xff]
      %v1163 = vld [vmem:[%s2 + $0x180] sm:$0xff]
      %v1164 = vld [vmem:[%s2 + $0x188] sm:$0xff]
      %v1165 = vld [vmem:[%s2 + $0x190] sm:$0xff]
      %v1166 = vld [vmem:[%s2 + $0x198] sm:$0xff]
      %v1167 = vld [vmem:[%s2 + $0x1a0] sm:$0xff]
      %v1168 = vld [vmem:[%s2 + $0x1a8] sm:$0xff]
      %v1169 = vld [vmem:[%s2 + $0x1b0] sm:$0xff]
      %v1170 = vld [vmem:[%s2 + $0x1b8] sm:$0xff]
      %v1171 = vld [vmem:[%s2 + $0x1c0] sm:$0xff]
      %v1172 = vld [vmem:[%s2 + $0x1c8] sm:$0xff]
      %v1173 = vld [vmem:[%s2 + $0x1d0] sm:$0xff]
      %v1174 = vld [vmem:[%s2 + $0x1d8] sm:$0xff]
      %v1175 = vld [vmem:[%s2 + $0x1e0] sm:$0xff]
      %v1176 = vld [vmem:[%s2 + $0x1e8] sm:$0xff]
      %v1177 = vld [vmem:[%s2 + $0x1f0] sm:$0xff]
      %v1178 = vld [vmem:[%s2 + $0x1f8] sm:$0xff]
      %1180 = vset.pattern.permute.xlu0 0
      %1181 = vperm.xlu0 %1180, %v1163
      %v1182 = vpop.permute.xlu0 %1181
      %1185 = vset.pattern.permute.xlu0 0
      %1186 = vperm.xlu0 %1185, %v1164
      %v1187 = vpop.permute.xlu0 %1186
      %1190 = vset.pattern.permute.xlu0 0
      %1191 = vperm.xlu0 %1190, %v1165
      %v1192 = vpop.permute.xlu0 %1191
      %1195 = vset.pattern.permute.xlu0 0
      %1196 = vperm.xlu0 %1195, %v1166
      %v1197 = vpop.permute.xlu0 %1196
      %1200 = vset.pattern.permute.xlu0 0
      %1201 = vperm.xlu0 %1200, %v1167
      %v1202 = vpop.permute.xlu0 %1201
      %1205 = vset.pattern.permute.xlu0 0
      %1206 = vperm.xlu0 %1205, %v1168
      %v1207 = vpop.permute.xlu0 %1206
      %1210 = vset.pattern.permute.xlu0 0
      %1211 = vperm.xlu0 %1210, %v1169
      %v1212 = vpop.permute.xlu0 %1211
      %1215 = vset.pattern.permute.xlu0 0
      %1216 = vperm.xlu0 %1215, %v1170
      %v1217 = vpop.permute.xlu0 %1216
      %1220 = vset.pattern.permute.xlu0 0
      %1221 = vperm.xlu0 %1220, %v1171
      %v1222 = vpop.permute.xlu0 %1221
      %1225 = vset.pattern.permute.xlu0 0
      %1226 = vperm.xlu0 %1225, %v1172
      %v1227 = vpop.permute.xlu0 %1226
      %1230 = vset.pattern.permute.xlu0 0
      %1231 = vperm.xlu0 %1230, %v1173
      %v1232 = vpop.permute.xlu0 %1231
      %1235 = vset.pattern.permute.xlu0 0
      %1236 = vperm.xlu0 %1235, %v1174
      %v1237 = vpop.permute.xlu0 %1236
      %1240 = vset.pattern.permute.xlu0 0
      %1241 = vperm.xlu0 %1240, %v1175
      %v1242 = vpop.permute.xlu0 %1241
      %1245 = vset.pattern.permute.xlu0 0
      %1246 = vperm.xlu0 %1245, %v1176
      %v1247 = vpop.permute.xlu0 %1246
      %1250 = vset.pattern.permute.xlu0 0
      %1251 = vperm.xlu0 %1250, %v1177
      %v1252 = vpop.permute.xlu0 %1251
      %1255 = vset.pattern.permute.xlu0 0
      %1256 = vperm.xlu0 %1255, %v1178
      %v1257 = vpop.permute.xlu0 %1256
      %1259 = vmatprep.subr.mxu0 0.0
      %1260 = vmatpush1.msra.mxu0 %v297
      %1261 = vmatprep.subr.mxu0 0.0
      %1262 = vmatpush1.msra.mxu0 %v298
      %1263 = vmatprep.subr.mxu0 0.0
      %1264 = vmatpush1.msra.mxu0 %v299
      %1265 = vmatprep.subr.mxu0 0.0
      %1266 = vmatpush1.msra.mxu0 %v300
      %1267 = vmatprep.subr.mxu0 0.0
      %1268 = vmatpush1.msra.mxu0 %v301
      %1269 = vmatprep.subr.mxu0 0.0
      %1270 = vmatpush1.msra.mxu0 %v302
      %1271 = vmatprep.subr.mxu0 0.0
      %1272 = vmatpush1.msra.mxu0 %v303
      %1273 = vmatprep.subr.mxu0 0.0
      %1274 = vmatpush1.msra.mxu0 %v304
      %1275 = vmatprep.subr.mxu0 0.0
      %1276 = vmatpush1.msra.mxu0 %v305
      %1277 = vmatprep.subr.mxu0 0.0
      %1278 = vmatpush1.msra.mxu0 %v306
      %1279 = vmatprep.subr.mxu0 0.0
      %1280 = vmatpush1.msra.mxu0 %v307
      %1281 = vmatprep.subr.mxu0 0.0
      %1282 = vmatpush1.msra.mxu0 %v308
      %1283 = vmatprep.subr.mxu0 0.0
      %1284 = vmatpush1.msra.mxu0 %v309
      %1285 = vmatprep.subr.mxu0 0.0
      %1286 = vmatpush1.msra.mxu0 %v310
      %1287 = vmatprep.subr.mxu0 0.0
      %1288 = vmatpush1.msra.mxu0 %v311
      %1289 = vmatprep.subr.mxu0 0.0
      %1290 = vmatpush1.msra.mxu0 %v312
      %1291 = vmatprep.subr.mxu0 0.0
      %1292 = vmatpush1.msra.mxu0 %v313
      %1293 = vmatprep.subr.mxu0 0.0
      %1294 = vmatpush1.msra.mxu0 %v314
      %1295 = vmatprep.subr.mxu0 0.0
      %1296 = vmatpush1.msra.mxu0 %v315
      %1297 = vmatprep.subr.mxu0 0.0
      %1298 = vmatpush1.msra.mxu0 %v316
      %1299 = vmatprep.subr.mxu0 0.0
      %1300 = vmatpush1.msra.mxu0 %v317
      %1301 = vmatprep.subr.mxu0 0.0
      %1302 = vmatpush1.msra.mxu0 %v318
      %1303 = vmatprep.subr.mxu0 0.0
      %1304 = vmatpush1.msra.mxu0 %v319
      %1305 = vmatprep.subr.mxu0 0.0
      %1306 = vmatpush1.msra.mxu0 %v320
      %1307 = vmatprep.subr.mxu0 0.0
      %1308 = vmatpush1.msra.mxu0 %v321
      %1309 = vmatprep.subr.mxu0 0.0
      %1310 = vmatpush1.msra.mxu0 %v322
      %1311 = vmatprep.subr.mxu0 0.0
      %1312 = vmatpush1.msra.mxu0 %v323
      %1313 = vmatprep.subr.mxu0 0.0
      %1314 = vmatpush1.msra.mxu0 %v324
      %1315 = vmatprep.subr.mxu0 0.0
      %1316 = vmatpush1.msra.mxu0 %v325
      %1317 = vmatprep.subr.mxu0 0.0
      %1318 = vmatpush1.msra.mxu0 %v326
      %1319 = vmatprep.subr.mxu0 0.0
      %1320 = vmatpush1.msra.mxu0 %v327
      %1321 = vmatprep.subr.mxu0 0.0
      %1322 = vmatpush1.msra.mxu0 %v328
      %1323 = vmatprep.mubr.f32.mxu0 %v1132
      %1324 = vmatmul.mubr.f32.gmra.mrb[0].mxu0 %v1131
      %v1325 = vpop.f32.mrb[0].mxu0
      %v1326 = vadd.f32 %v1182, %v1325
      %v1327 = vpop.f32.mrb[0].mxu0
      %1328 = vmatprep.mubr.f32.mxu0 %v1134
      %1329 = vmatmul.mubr.f32.gmra.mrb[0].mxu0 %v1133
      %v1330 = vpop.f32.mrb[0].mxu0
      %v1331 = vadd.f32 %v1187, %v1330
      %v1332 = vpop.f32.mrb[0].mxu0
      %1333 = vmatprep.mubr.f32.mxu0 %v1136
      %1334 = vmatmul.mubr.f32.gmra.mrb[0].mxu0 %v1135
      %v1335 = vpop.f32.mrb[0].mxu0
      %v1336 = vadd.f32 %v1192, %v1335
      %v1337 = vpop.f32.mrb[0].mxu0
      %1338 = vmatprep.mubr.f32.mxu0 %v1138
      %1339 = vmatmul.mubr.f32.gmra.mrb[0].mxu0 %v1137
      %v1340 = vpop.f32.mrb[0].mxu0
      %v1341 = vadd.f32 %v1197, %v1340
      %v1342 = vpop.f32.mrb[0].mxu0
      %1343 = vmatprep.mubr.f32.mxu0 %v1140
      %1344 = vmatmul.mubr.f32.gmra.mrb[0].mxu0 %v1139
      %v1345 = vpop.f32.mrb[0].mxu0
      %v1346 = vadd.f32 %v1202, %v1345
      %v1347 = vpop.f32.mrb[0].mxu0
      %1348 = vmatprep.mubr.f32.mxu0 %v1142
      %1349 = vmatmul.mubr.f32.gmra.mrb[0].mxu0 %v1141
      %v1350 = vpop.f32.mrb[0].mxu0
      %v1351 = vadd.f32 %v1207, %v1350
      %v1352 = vpop.f32.mrb[0].mxu0
      %1353 = vmatprep.mubr.f32.mxu0 %v1144
      %1354 = vmatmul.mubr.f32.gmra.mrb[0].mxu0 %v1143
      %v1355 = vpop.f32.mrb[0].mxu0
      %v1356 = vadd.f32 %v1212, %v1355
      %v1357 = vpop.f32.mrb[0].mxu0
      %1358 = vmatprep.mubr.f32.mxu0 %v1146
      %1359 = vmatmul.mubr.f32.gmra.mrb[0].mxu0 %v1145
      %v1360 = vpop.f32.mrb[0].mxu0
      %v1361 = vadd.f32 %v1217, %v1360
      %v1362 = vpop.f32.mrb[0].mxu0
      %1363 = vmatprep.mubr.f32.mxu0 %v1148
      %1364 = vmatmul.mubr.f32.gmra.mrb[0].mxu0 %v1147
      %v1365 = vpop.f32.mrb[0].mxu0
      %v1366 = vadd.f32 %v1222, %v1365
      %v1367 = vpop.f32.mrb[0].mxu0
      %1368 = vmatprep.mubr.f32.mxu0 %v1150
      %1369 = vmatmul.mubr.f32.gmra.mrb[0].mxu0 %v1149
      %v1370 = vpop.f32.mrb[0].mxu0
      %v1371 = vadd.f32 %v1227, %v1370
      %v1372 = vpop.f32.mrb[0].mxu0
      %1373 = vmatprep.mubr.f32.mxu0 %v1152
      %1374 = vmatmul.mubr.f32.gmra.mrb[0].mxu0 %v1151
      %v1375 = vpop.f32.mrb[0].mxu0
      %v1376 = vadd.f32 %v1232, %v1375
      %v1377 = vpop.f32.mrb[0].mxu0
      %1378 = vmatprep.mubr.f32.mxu0 %v1154
      %1379 = vmatmul.mubr.f32.gmra.mrb[0].mxu0 %v1153
      %v1380 = vpop.f32.mrb[0].mxu0
      %v1381 = vadd.f32 %v1237, %v1380
      %v1382 = vpop.f32.mrb[0].mxu0
      %1383 = vmatprep.mubr.f32.mxu0 %v1156
      %1384 = vmatmul.mubr.f32.gmra.mrb[0].mxu0 %v1155
      %v1385 = vpop.f32.mrb[0].mxu0
      %v1386 = vadd.f32 %v1242, %v1385
      %v1387 = vpop.f32.mrb[0].mxu0
      %1388 = vmatprep.mubr.f32.mxu0 %v1158
      %1389 = vmatmul.mubr.f32.gmra.mrb[0].mxu0 %v1157
      %v1390 = vpop.f32.mrb[0].mxu0
      %v1391 = vadd.f32 %v1247, %v1390
      %v1392 = vpop.f32.mrb[0].mxu0
      %1393 = vmatprep.mubr.f32.mxu0 %v1160
      %1394 = vmatmul.mubr.f32.gmra.mrb[0].mxu0 %v1159
      %v1395 = vpop.f32.mrb[0].mxu0
      %v1396 = vadd.f32 %v1252, %v1395
      %v1397 = vpop.f32.mrb[0].mxu0
      %1398 = vmatprep.mubr.f32.mxu0 %v1162
      %1399 = vmatmul.mubr.f32.gmra.mrb[0].mxu0 %v1161
      %v1400 = vpop.f32.mrb[0].mxu0
      %v1401 = vadd.f32 %v1257, %v1400
      %v1402 = vpop.f32.mrb[0].mxu0
      %1403 = vdwg.mxu0
      %1404 = vst [vmem:[%s296] sm:$0xff] %v1326
      %1405 = vst [vmem:[%s296 + $0x8] sm:$0xff] %v1331
      %1406 = vst [vmem:[%s296 + $0x10] sm:$0xff] %v1336
      %1407 = vst [vmem:[%s296 + $0x18] sm:$0xff] %v1341
      %1408 = vst [vmem:[%s296 + $0x20] sm:$0xff] %v1346
      %1409 = vst [vmem:[%s296 + $0x28] sm:$0xff] %v1351
      %1410 = vst [vmem:[%s296 + $0x30] sm:$0xff] %v1356
      %1411 = vst [vmem:[%s296 + $0x38] sm:$0xff] %v1361
      %1412 = vst [vmem:[%s296 + $0x40] sm:$0xff] %v1366
      %1413 = vst [vmem:[%s296 + $0x48] sm:$0xff] %v1371
      %1414 = vst [vmem:[%s296 + $0x50] sm:$0xff] %v1376
      %1415 = vst [vmem:[%s296 + $0x58] sm:$0xff] %v1381
      %1416 = vst [vmem:[%s296 + $0x60] sm:$0xff] %v1386
      %1417 = vst [vmem:[%s296 + $0x68] sm:$0xff] %v1391
      %1418 = vst [vmem:[%s296 + $0x70] sm:$0xff] %v1396
      %1419 = vst [vmem:[%s296 + $0x78] sm:$0xff] %v1401
      %p1420 = scmp.lt.s32.totalorder %s21, 1
      %s1421 = scalar_select %p1420, %s21, 1
      %p1422 = scmp.lt.s32.totalorder %s22, 0
      %s1423 = scalar_select %p1422, %s22, 0
      %s1424 = smul.addr %s1421, 16
      %s1425 = sadd.s32 %s1423, %s1424
      %s1426 = smul.addr %s1425, 8
      %s1427 = scalar_lea.vmem %s3, %s1426
      %p1428 = scmp.lt.s32.totalorder %s21, 1
      %s1429 = scalar_select %p1428, %s21, 1
      %p1430 = scmp.lt.s32.totalorder %s22, 0
      %s1431 = scalar_select %p1430, %s22, 0
      %s1432 = smul.addr %s1429, 32
      %s1433 = sadd.s32 %s1431, %s1432
      %s1434 = smul.addr %s1433, 8
      %s1435 = scalar_lea.vmem %s4, %s1434
      %p1436 = scmp.lt.s32.totalorder %s21, 1
      %s1437 = scalar_select %p1436, %s21, 1
      %p1438 = scmp.lt.s32.totalorder %s22, 0
      %s1439 = scalar_select %p1438, %s22, 0
      %s1440 = smul.addr %s1437, 16
      %s1441 = sadd.s32 %s1439, %s1440
      %s1442 = smul.addr %s1441, 8
      %s1443 = scalar_lea.vmem %s5, %s1442
      // Predicated region
      $region33: #{temporal_key_value.1} parent=31 // pred_check
        %p1444 = pneg %p119
      $region34: #{temporal_key_value.1} parent=31 // pred_check_branch
        %1446 = sbr.rel (%p1444) target = $region36
      $region35: #{temporal_key_value.1} parent=31 // pred_region
        _
      $region36: #{temporal_key_value.1} parent=31 // pred_fallthru
        _
      // Predicated region
      $region37: #{temporal_key_value.1} parent=31 // pred_check
        %p1447 = pneg %p147
      $region38: #{temporal_key_value.1} parent=31 // pred_check_branch
        %1449 = sbr.rel (%p1447) target = $region40
      $region39: #{temporal_key_value.1} parent=31 // pred_region
        _
      $region40: #{temporal_key_value.1} parent=31 // pred_fallthru
        _
      // Predicated region
      $region41: #{temporal_key_value.1} parent=31 // pred_check
        %p1450 = pneg %p175
      $region42: #{temporal_key_value.1} parent=31 // pred_check_branch
        %1452 = sbr.rel (%p1450) target = $region44
      $region43: #{temporal_key_value.1} parent=31 // pred_region
        _
      $region44: #{temporal_key_value.1} parent=31 // pred_fallthru
        _
    $region32: #{temporal_key_value.1} parent=5 // pred_fallthru
      _
    %p1453 = scmp.le.s32.totalorder 2, %s12
    // Predicated region
    $region45: #{temporal_key_value.1} parent=5 // pred_check
      %p1454 = pneg %p1453
    $region46: #{temporal_key_value.1} parent=5 // pred_check_branch
      %1456 = sbr.rel (%p1454) target = $region48
    $region47: #{temporal_key_value.1} parent=5 // pred_region
      %s1457 = ssub.s32 %s12, 2
      // Predicated region
      $region49: #{temporal_key_value.1} parent=47 // pred_check
        %p1458 = pneg %p125
      $region50: #{temporal_key_value.1} parent=47 // pred_check_branch
        %1460 = sbr.rel (%p1458) target = $region52
      $region51: #{temporal_key_value.1} parent=47 // pred_region
        %p1461 = scmp.lt.s32.totalorder %s23, 1
        %s1462 = scalar_select %p1461, %s23, 1
        %p1463 = scmp.lt.s32.totalorder %s24, 0
        %s1464 = scalar_select %p1463, %s24, 0
        %s1465 = smul.addr %s1462, 16
        %s1466 = sadd.s32 %s1464, %s1465
        %s1467 = smul.addr %s1466, 8
        %s1468 = scalar_lea.vmem %s3, %s1467
      $region52: #{temporal_key_value.1} parent=47 // pred_fallthru
        _
      // Predicated region
      $region53: #{temporal_key_value.1} parent=47 // pred_check
        %p1469 = pneg %p153
      $region54: #{temporal_key_value.1} parent=47 // pred_check_branch
        %1471 = sbr.rel (%p1469) target = $region56
      $region55: #{temporal_key_value.1} parent=47 // pred_region
        %p1472 = scmp.lt.s32.totalorder %s23, 1
        %s1473 = scalar_select %p1472, %s23, 1
        %p1474 = scmp.lt.s32.totalorder %s24, 0
        %s1475 = scalar_select %p1474, %s24, 0
        %s1476 = smul.addr %s1473, 32
        %s1477 = sadd.s32 %s1475, %s1476
        %s1478 = smul.addr %s1477, 8
        %s1479 = scalar_lea.vmem %s4, %s1478
      $region56: #{temporal_key_value.1} parent=47 // pred_fallthru
        _
      // Predicated region
      $region57: #{temporal_key_value.1} parent=47 // pred_check
        %p1480 = pneg %p181
      $region58: #{temporal_key_value.1} parent=47 // pred_check_branch
        %1482 = sbr.rel (%p1480) target = $region60
      $region59: #{temporal_key_value.1} parent=47 // pred_region
        %p1483 = scmp.lt.s32.totalorder %s23, 1
        %s1484 = scalar_select %p1483, %s23, 1
        %p1485 = scmp.lt.s32.totalorder %s24, 0
        %s1486 = scalar_select %p1485, %s24, 0
        %s1487 = smul.addr %s1484, 16
        %s1488 = sadd.s32 %s1486, %s1487
        %s1489 = smul.addr %s1488, 8
        %s1490 = scalar_lea.vmem %s5, %s1489
      $region60: #{temporal_key_value.1} parent=47 // pred_fallthru
        _
    $region48: #{temporal_key_value.1} parent=5 // pred_fallthru
      _
  $region6: #{temporal_key_value.1} parent=0 // loop_footer
    %s16 = sadd.s32 1, %s12
  $region7: #{temporal_key_value.1} parent=0 // loop_footer_branch
    %11 = sbr.rel target = $region3
  $region8: #{temporal_key_value.1} parent=0 // loop_exit
    _

</llo_original>
